<compile_context>
chip_gen: v5e
topology: v5e:2x2
jax: 0.10.0
libtpu: 0.0.40
codegen_flags: <defaults>
</compile_context>

<pallas_src>
import math
import functools

import jax
import jax.numpy as jnp
from jax.experimental import pallas as pl
from jax.experimental.pallas import tpu as pltpu


def positional_embedding(T, C):
    # Mirrors PositionalEmbedding() exactly (base 1000, distinct even/odd exponents).
    pos = jnp.arange(T, dtype=jnp.float32)[:, None]
    even = jnp.arange(0, C, 2, dtype=jnp.float32)
    odd = jnp.arange(1, C, 2, dtype=jnp.float32)
    pe = jnp.zeros((T, C), dtype=jnp.float32)
    pe = pe.at[:, 0::2].set(jnp.sin(pos / jnp.power(1000.0, even / C)))
    pe = pe.at[:, 1::2].set(jnp.cos(pos / jnp.power(1000.0, odd / C)))
    return pe


def _layer_norm(x, gamma, beta, eps=1e-5):
    mu = jnp.mean(x, axis=-1, keepdims=True)
    var = jnp.mean((x - mu) ** 2, axis=-1, keepdims=True)
    return (x - mu) * jax.lax.rsqrt(var + eps) * gamma + beta


def transformer_layer_kernel(x_ref, pe_ref,
                             wqkv_ref, bqkv_ref,
                             wo_ref, bo_ref,
                             g1_ref, be1_ref,
                             w1_ref, b1_ref, w2_ref, b2_ref,
                             g2_ref, be2_ref,
                             out_ref, *, n_heads, d_head, seqs_per_block, seq_len):
    H, E, G, T = n_heads, d_head, seqs_per_block, seq_len
    C = H * E
    GT = G * T

    # Positional embedding broadcast over the G sequences in-kernel
    # (single (T, C) table instead of a G-times tiled slab).
    x2d = (x_ref[...].reshape(G, T, C) + pe_ref[...]).reshape(GT, C)    # f32

    # Fused Q/K/V projection: bf16 operands on the MXU, f32 accumulation,
    # f32 bias add.  The 1/sqrt(E) attention scale is pre-folded into the
    # Q columns of wqkv/bqkv by the wrapper.
    qkv = jnp.dot(x2d.astype(jnp.bfloat16), wqkv_ref[...],
                  preferred_element_type=jnp.float32) + bqkv_ref[...]
    qkv_b = qkv.astype(jnp.bfloat16)                                    # (GT, 3C)

    # Attention, batched over the G sequences per head.  Softmax statistics
    # stay in f32; the divide uses the EUP reciprocal (off the VALU).
    # The output projection is fused into the head loop:
    #     concat_h(o_h) @ Wo == sum_h o_h @ Wo[h*E:(h+1)*E, :]
    # so no lane-concat is needed and only one (GT, C) accumulator stays live.
    # TODO(synk): at production d_model the static head loop should become a
    # single (G*H)-batched einsum over a head-major (G*H, T, E) layout; at
    # E=8 the required sublane<->lane relayout is not a supported Mosaic
    # shape-cast, so the proven lane-slice form is kept here.
    attn = None
    for h in range(H):                       # static unroll, H is small
        lo = h * E
        qh = qkv_b[:, 0 * C + lo:0 * C + lo + E].reshape(G, T, E)
        kh = qkv_b[:, 1 * C + lo:1 * C + lo + E].reshape(G, T, E)
        vh = qkv_b[:, 2 * C + lo:2 * C + lo + E].reshape(G, T, E)
        s = jnp.einsum('gqe,gke->gqk', qh, kh,
                       preferred_element_type=jnp.float32)              # (G, T, T)
        s = s - jnp.max(s, axis=-1, keepdims=True)                       # stable softmax
        p = jnp.exp(s)
        a = (p * pl.reciprocal(jnp.sum(p, axis=-1, keepdims=True),
                               approx=True)).astype(jnp.bfloat16)
        oh = jnp.einsum('gqk,gke->gqe', a, vh,
                        preferred_element_type=jnp.float32)              # (G, T, E)
        contrib = jnp.dot(oh.reshape(GT, E).astype(jnp.bfloat16),
                          wo_ref[lo:lo + E, :],
                          preferred_element_type=jnp.float32)            # (GT, C)
        attn = contrib if attn is None else attn + contrib
    attn = attn + bo_ref[...]

    # Residual + LayerNorm in f32.
    y = _layer_norm(x2d + attn, g1_ref[...], be1_ref[...])               # norm1

    # FFN: conv1d(kernel_size=1) == per-timestep linear; bf16 MXU operands.
    h1 = jnp.maximum(
        jnp.dot(y.astype(jnp.bfloat16), w1_ref[...],
                preferred_element_type=jnp.float32) + b1_ref[...], 0.0)
    h2 = jnp.dot(h1.astype(jnp.bfloat16), w2_ref[...],
                 preferred_element_type=jnp.float32) + b2_ref[...]

    # TODO(synk): lane-dense store -- repacking the (GT, C=32) result to
    # (G, T*C) needs a sub-(8,128)-tile sublane->lane shape-cast that Mosaic
    # does not support at C=32, and at these block sizes (GT*C = 512 elems) it
    # would not raise store/vreg utilisation anyway; revisit at larger C.
    out_ref[...] = _layer_norm(y + h2, g2_ref[...], be2_ref[...])        # norm2


def _pick_seqs_per_block(BN, T):
    """Sequences per grid step.

    Prefer >= 4 grid steps (>= 2 per TensorCore on v7x, pipeline depth >= 2 on
    single-core v5e/v6e), taking the largest block that keeps the (G*T, C)
    block's sublane dim a multiple of 8 (or the full array).
    """
    valid = [g for g in range(1, BN + 1)
             if BN % g == 0 and ((g * T) % 8 == 0 or g == BN)]
    if not valid:
        return BN
    deep = [g for g in valid if BN // g >= 4]
    if deep:
        return max(deep)
    return min(valid)          # too few sequences: maximise grid depth instead


def transformer_layer(x, params, n_heads, seqs_per_block=None):
    # x: (b, C, N, T) with C == d_model
    b, C, N, T = x.shape
    H = n_heads
    E = C // H
    d_ff = params["w1"].shape[1]
    BN = b * N

    if seqs_per_block is None:
        seqs_per_block = _pick_seqs_per_block(BN, T)
    G = seqs_per_block
    assert BN % G == 0, (BN, G)
    nblk = BN // G

    # (b, C, N, T) -> (BN, T, C) -> flat (BN*T, C) rows.
    # TODO(synk): consider CompilerParams(allow_input_fusion=...) so this
    # transpose does not materialise an extra HBM copy of the activations; the
    # x slab could also be stored bf16 in HBM at production sizes.
    xs = jnp.transpose(x, (0, 2, 3, 1)).reshape(BN * T, C).astype(jnp.float32)
    pe = positional_embedding(T, C)                              # (T, C) f32

    # Fused Q/K/V weight (C, 3C) with the 1/sqrt(E) attention scale folded
    # into the Q columns (weight AND bias).  MXU weights packed as bf16;
    # biases stay f32 (added after f32 accumulation).
    scale = 1.0 / math.sqrt(E)
    wqkv = jnp.concatenate([params["wq"] * scale, params["wk"], params["wv"]],
                           axis=1).astype(jnp.bfloat16)
    bqkv = jnp.concatenate([params["bq"] * scale, params["bk"], params["bv"]],
                           axis=1).astype(jnp.float32)
    wo = params["wo"].astype(jnp.bfloat16)
    w1 = params["w1"].astype(jnp.bfloat16)
    w2 = params["w2"].astype(jnp.bfloat16)

    def full2d(shape):
        return pl.BlockSpec(shape, lambda i: (0, 0))

    in_specs = [
        pl.BlockSpec((G * T, C), lambda i: (i, 0)),          # x slab
        full2d((T, C)),                                      # positional embedding
        full2d((C, 3 * C)), full2d((1, 3 * C)),              # fused Wqkv, bqkv
        full2d((C, C)), full2d((1, C)),                      # Wo, bo
        full2d((1, C)), full2d((1, C)),                      # norm1 gamma/beta
        full2d((C, d_ff)), full2d((1, d_ff)),                # conv1 (as linear)
        full2d((d_ff, C)), full2d((1, C)),                   # conv2 (as linear)
        full2d((1, C)), full2d((1, C)),                      # norm2 gamma/beta
    ]

    kernel = functools.partial(transformer_layer_kernel,
                               n_heads=H, d_head=E,
                               seqs_per_block=G, seq_len=T)
    out = pl.pallas_call(
        kernel,
        out_shape=jax.ShapeDtypeStruct((BN * T, C), jnp.float32),
        grid_spec=pltpu.PrefetchScalarGridSpec(
            num_scalar_prefetch=0,
            grid=(nblk,),
            in_specs=in_specs,
            out_specs=pl.BlockSpec((G * T, C), lambda i: (i, 0)),
        ),
        compiler_params=pltpu.CompilerParams(
            dimension_semantics=("parallel",),
            # Small blocks + deep grid keep the working set far below v7x's
            # 64 MiB/TC; 32 MiB also lifts v5e's 16 MiB scoped default.
            vmem_limit_bytes=32 * 1024 * 1024),
    )(xs, pe,
      wqkv, bqkv,
      wo, params["bo"],
      params["g1"], params["be1"],
      w1, params["b1"], w2, params["b2"],
      params["g2"], params["be2"])

    out = out.reshape(b, N, T, C)
    return jnp.transpose(out, (0, 3, 1, 2))                  # (b, C, N, T)


def reference(x, params, n_heads):
    # Pure-JAX f32 reference mirroring the PyTorch forward (eval mode, dropout=0).
    b, C, N, T = x.shape
    H = n_heads
    E = C // H
    xs = jnp.transpose(x, (0, 2, 3, 1)).reshape(b * N, T, C)
    xs = xs + positional_embedding(T, C)
    q = (xs @ params["wq"] + params["bq"]).reshape(b * N, T, H, E)
    k = (xs @ params["wk"] + params["bk"]).reshape(b * N, T, H, E)
    v = (xs @ params["wv"] + params["bv"]).reshape(b * N, T, H, E)
    scores = jnp.einsum("blhe,bshe->bhls", q, k) / math.sqrt(E)
    A = jax.nn.softmax(scores, axis=-1)
    V = jnp.einsum("bhls,bshd->blhd", A, v).reshape(b * N, T, H * E)
    attn = V @ params["wo"] + params["bo"]
    x2 = xs + attn
    y = _layer_norm(x2, params["g1"], params["be1"])
    h1 = jax.nn.relu(y @ params["w1"] + params["b1"])
    h2 = h1 @ params["w2"] + params["b2"]
    out = _layer_norm(y + h2, params["g2"], params["be2"])
    out = out.reshape(b, N, T, C)
    return jnp.transpose(out, (0, 3, 1, 2))


if __name__ == "__main__":
    # Small deterministic config: b=2, d_model=C=32, N=4 nodes, T=8 time steps.
    b, d_model, N, T = 2, 32, 4, 8
    n_heads, d_ff = 4, 32

    key = jax.random.PRNGKey(0)
    keys = jax.random.split(key, 16)

    def w(k, shape):
        return 0.1 * jax.random.normal(k, shape, dtype=jnp.float32)

    # Synthetic deterministic parameters (math-layout: y = x @ W + b; conv1/conv2
    # kernel_size=1 weights stored as (in, out) / (d_ff, d_model) linears).
    params = {
        "wq": w(keys[0], (d_model, d_model)), "bq": w(keys[1], (1, d_model)),
        "wk": w(keys[2], (d_model, d_model)), "bk": w(keys[3], (1, d_model)),
        "wv": w(keys[4], (d_model, d_model)), "bv": w(keys[5], (1, d_model)),
        "wo": w(keys[6], (d_model, d_model)), "bo": w(keys[7], (1, d_model)),
        "g1": jnp.ones((1, d_model), jnp.float32),
        "be1": jnp.zeros((1, d_model), jnp.float32),
        "w1": w(keys[8], (d_model, d_ff)),  "b1": w(keys[9], (1, d_ff)),
        "w2": w(keys[10], (d_ff, d_model)), "b2": w(keys[11], (1, d_model)),
        "g2": jnp.ones((1, d_model), jnp.float32),
        "be2": jnp.zeros((1, d_model), jnp.float32),
    }

    x = jax.random.normal(keys[12], (b, d_model, N, T), dtype=jnp.float32)

    out = transformer_layer(x, params, n_heads)
    out = jax.block_until_ready(out)

    ref = reference(x, params, n_heads)
    assert out.shape == (b, d_model, N, T), out.shape
    # bf16 MXU operands + EUP approximate reciprocal in the softmax: compare
    # against the f32 reference at a correspondingly relaxed tolerance.
    err = float(jnp.max(jnp.abs(out - ref)))
    assert err < 5e-2, err

    print("KERNEL_OK")
</pallas_src>

<mosaic_0001>
module attributes {stable_mosaic.version = 11 : i64} {
  func.func @transformer_layer_kernel(%arg0: i32, %arg1: memref<16x32xf32, #tpu.memory_space<vmem>>, %arg2: memref<8x32xf32, #tpu.memory_space<vmem>>, %arg3: memref<32x96xbf16, #tpu.memory_space<vmem>>, %arg4: memref<1x96xf32, #tpu.memory_space<vmem>>, %arg5: memref<32x32xbf16, #tpu.memory_space<vmem>>, %arg6: memref<1x32xf32, #tpu.memory_space<vmem>>, %arg7: memref<1x32xf32, #tpu.memory_space<vmem>>, %arg8: memref<1x32xf32, #tpu.memory_space<vmem>>, %arg9: memref<32x32xbf16, #tpu.memory_space<vmem>>, %arg10: memref<1x32xf32, #tpu.memory_space<vmem>>, %arg11: memref<32x32xbf16, #tpu.memory_space<vmem>>, %arg12: memref<1x32xf32, #tpu.memory_space<vmem>>, %arg13: memref<1x32xf32, #tpu.memory_space<vmem>>, %arg14: memref<1x32xf32, #tpu.memory_space<vmem>>, %arg15: memref<16x32xf32, #tpu.memory_space<vmem>>) attributes {dimension_semantics = [#tpu.dimension_semantics<parallel>], iteration_bounds = array<i64: 4>, scalar_prefetch = 0 : i64, scratch_operands = 0 : i64, tpu.core_type = #tpu.core_type<tc>, window_params = [{transform_indices = @transform_0, window_bounds = array<i64: 16, 32>}, {pipeline_mode = #tpu.pipeline_mode<synchronous>, transform_indices = @transform_1, window_bounds = array<i64: 8, 32>}, {pipeline_mode = #tpu.pipeline_mode<synchronous>, transform_indices = @transform_2, window_bounds = array<i64: 32, 96>}, {pipeline_mode = #tpu.pipeline_mode<synchronous>, transform_indices = @transform_3, window_bounds = array<i64: 1, 96>}, {pipeline_mode = #tpu.pipeline_mode<synchronous>, transform_indices = @transform_4, window_bounds = array<i64: 32, 32>}, {pipeline_mode = #tpu.pipeline_mode<synchronous>, transform_indices = @transform_5, window_bounds = array<i64: 1, 32>}, {pipeline_mode = #tpu.pipeline_mode<synchronous>, transform_indices = @transform_6, window_bounds = array<i64: 1, 32>}, {pipeline_mode = #tpu.pipeline_mode<synchronous>, transform_indices = @transform_7, window_bounds = array<i64: 1, 32>}, {pipeline_mode = #tpu.pipeline_mode<synchronous>, transform_indices = @transform_8, window_bounds = array<i64: 32, 32>}, {pipeline_mode = #tpu.pipeline_mode<synchronous>, transform_indices = @transform_9, window_bounds = array<i64: 1, 32>}, {pipeline_mode = #tpu.pipeline_mode<synchronous>, transform_indices = @transform_10, window_bounds = array<i64: 32, 32>}, {pipeline_mode = #tpu.pipeline_mode<synchronous>, transform_indices = @transform_11, window_bounds = array<i64: 1, 32>}, {pipeline_mode = #tpu.pipeline_mode<synchronous>, transform_indices = @transform_12, window_bounds = array<i64: 1, 32>}, {pipeline_mode = #tpu.pipeline_mode<synchronous>, transform_indices = @transform_13, window_bounds = array<i64: 1, 32>}, {transform_indices = @transform_14, window_bounds = array<i64: 16, 32>}]} {
    %c0 = arith.constant 0 : index
    %c0_0 = arith.constant 0 : index
    %0 = vector.load %arg1[%c0, %c0_0] : memref<16x32xf32, #tpu.memory_space<vmem>>, vector<16x32xf32>
    %1 = vector.shape_cast %0 : vector<16x32xf32> to vector<2x8x32xf32>
    %c0_1 = arith.constant 0 : index
    %c0_2 = arith.constant 0 : index
    %2 = vector.load %arg2[%c0_1, %c0_2] : memref<8x32xf32, #tpu.memory_space<vmem>>, vector<8x32xf32>
    %3 = vector.shape_cast %2 : vector<8x32xf32> to vector<1x8x32xf32>
    %4 = vector.broadcast %3 : vector<1x8x32xf32> to vector<2x8x32xf32>
    %5 = arith.addf %1, %4 : vector<2x8x32xf32>
    %6 = vector.shape_cast %5 : vector<2x8x32xf32> to vector<16x32xf32>
    %7 = arith.truncf %6 : vector<16x32xf32> to vector<16x32xbf16>
    %c0_3 = arith.constant 0 : index
    %c0_4 = arith.constant 0 : index
    %8 = vector.load %arg3[%c0_3, %c0_4] : memref<32x96xbf16, #tpu.memory_space<vmem>>, vector<32x96xbf16>
    %cst = arith.constant dense<0.000000e+00> : vector<16x96xf32>
    %9 = tpu.matmul %7, %8, %cst {dimension_numbers = #tpu.dot_dimension_numbers<[1], [0], [0], [1], [0, 0, 1, 1], [], []>} : vector<16x32xbf16>, vector<32x96xbf16>, vector<16x96xf32> -> vector<16x96xf32>
    %c0_5 = arith.constant 0 : index
    %c0_6 = arith.constant 0 : index
    %10 = vector.load %arg4[%c0_5, %c0_6] : memref<1x96xf32, #tpu.memory_space<vmem>>, vector<1x96xf32>
    %11 = vector.broadcast %10 : vector<1x96xf32> to vector<16x96xf32>
    %12 = arith.addf %9, %11 : vector<16x96xf32>
    %13 = arith.truncf %12 : vector<16x96xf32> to vector<16x96xbf16>
    %14 = vector.extract_strided_slice %13 {offsets = [0, 0], sizes = [16, 8], strides = [1, 1]} : vector<16x96xbf16> to vector<16x8xbf16>
    %15 = vector.shape_cast %14 : vector<16x8xbf16> to vector<2x8x8xbf16>
    %16 = vector.extract_strided_slice %13 {offsets = [0, 32], sizes = [16, 8], strides = [1, 1]} : vector<16x96xbf16> to vector<16x8xbf16>
    %17 = vector.shape_cast %16 : vector<16x8xbf16> to vector<2x8x8xbf16>
    %18 = vector.extract_strided_slice %13 {offsets = [0, 64], sizes = [16, 8], strides = [1, 1]} : vector<16x96xbf16> to vector<16x8xbf16>
    %19 = vector.shape_cast %18 : vector<16x8xbf16> to vector<2x8x8xbf16>
    "tpu.trace_start"() <{level = 10 : i32, message = "gqe,gke->gqk"}> : () -> ()
    %cst_7 = arith.constant dense<0.000000e+00> : vector<2x8x8xf32>
    %20 = tpu.matmul %15, %17, %cst_7 {dimension_numbers = #tpu.dot_dimension_numbers<[2], [2], [1], [1], [0, 0, 0, 1, 1, 1], [0], [0]>} : vector<2x8x8xbf16>, vector<2x8x8xbf16>, vector<2x8x8xf32> -> vector<2x8x8xf32>
    "tpu.trace_stop"() : () -> ()
    %cst_8 = arith.constant dense<0xFF800000> : vector<2x8xf32>
    %21 = vector.multi_reduction <maximumf>, %20, %cst_8 [2] : vector<2x8x8xf32> to vector<2x8xf32>
    %22 = vector.shape_cast %21 : vector<2x8xf32> to vector<2x8x1xf32>
    %23 = vector.broadcast %22 : vector<2x8x1xf32> to vector<2x8x8xf32>
    %24 = arith.subf %20, %23 : vector<2x8x8xf32>
    %25 = math.exp %24 : vector<2x8x8xf32>
    %cst_9 = arith.constant dense<0.000000e+00> : vector<2x8xf32>
    %26 = vector.multi_reduction <add>, %25, %cst_9 [2] : vector<2x8x8xf32> to vector<2x8xf32>
    %27 = vector.shape_cast %26 : vector<2x8xf32> to vector<2x8x1xf32>
    %28 = tpu.reciprocal %27 {approx = true} : vector<2x8x1xf32> -> vector<2x8x1xf32>
    %29 = vector.broadcast %28 : vector<2x8x1xf32> to vector<2x8x8xf32>
    %30 = arith.mulf %25, %29 : vector<2x8x8xf32>
    %31 = arith.truncf %30 : vector<2x8x8xf32> to vector<2x8x8xbf16>
    "tpu.trace_start"() <{level = 10 : i32, message = "gqk,gke->gqe"}> : () -> ()
    %cst_10 = arith.constant dense<0.000000e+00> : vector<2x8x8xf32>
    %32 = tpu.matmul %31, %19, %cst_10 {dimension_numbers = #tpu.dot_dimension_numbers<[2], [1], [1], [2], [0, 0, 0, 1, 1, 2], [0], [0]>} : vector<2x8x8xbf16>, vector<2x8x8xbf16>, vector<2x8x8xf32> -> vector<2x8x8xf32>
    "tpu.trace_stop"() : () -> ()
    %33 = vector.shape_cast %32 : vector<2x8x8xf32> to vector<16x8xf32>
    %34 = arith.truncf %33 : vector<16x8xf32> to vector<16x8xbf16>
    %c0_11 = arith.constant 0 : index
    %c0_12 = arith.constant 0 : index
    %35 = vector.load %arg5[%c0_11, %c0_12] : memref<32x32xbf16, #tpu.memory_space<vmem>>, vector<8x32xbf16>
    %cst_13 = arith.constant dense<0.000000e+00> : vector<16x32xf32>
    %36 = tpu.matmul %34, %35, %cst_13 {dimension_numbers = #tpu.dot_dimension_numbers<[1], [0], [0], [1], [0, 0, 1, 1], [], []>} : vector<16x8xbf16>, vector<8x32xbf16>, vector<16x32xf32> -> vector<16x32xf32>
    %37 = vector.extract_strided_slice %13 {offsets = [0, 8], sizes = [16, 8], strides = [1, 1]} : vector<16x96xbf16> to vector<16x8xbf16>
    %38 = vector.shape_cast %37 : vector<16x8xbf16> to vector<2x8x8xbf16>
    %39 = vector.extract_strided_slice %13 {offsets = [0, 40], sizes = [16, 8], strides = [1, 1]} : vector<16x96xbf16> to vector<16x8xbf16>
    %40 = vector.shape_cast %39 : vector<16x8xbf16> to vector<2x8x8xbf16>
    %41 = vector.extract_strided_slice %13 {offsets = [0, 72], sizes = [16, 8], strides = [1, 1]} : vector<16x96xbf16> to vector<16x8xbf16>
    %42 = vector.shape_cast %41 : vector<16x8xbf16> to vector<2x8x8xbf16>
    "tpu.trace_start"() <{level = 10 : i32, message = "gqe,gke->gqk"}> : () -> ()
    %cst_14 = arith.constant dense<0.000000e+00> : vector<2x8x8xf32>
    %43 = tpu.matmul %38, %40, %cst_14 {dimension_numbers = #tpu.dot_dimension_numbers<[2], [2], [1], [1], [0, 0, 0, 1, 1, 1], [0], [0]>} : vector<2x8x8xbf16>, vector<2x8x8xbf16>, vector<2x8x8xf32> -> vector<2x8x8xf32>
    "tpu.trace_stop"() : () -> ()
    %cst_15 = arith.constant dense<0xFF800000> : vector<2x8xf32>
    %44 = vector.multi_reduction <maximumf>, %43, %cst_15 [2] : vector<2x8x8xf32> to vector<2x8xf32>
    %45 = vector.shape_cast %44 : vector<2x8xf32> to vector<2x8x1xf32>
    %46 = vector.broadcast %45 : vector<2x8x1xf32> to vector<2x8x8xf32>
    %47 = arith.subf %43, %46 : vector<2x8x8xf32>
    %48 = math.exp %47 : vector<2x8x8xf32>
    %cst_16 = arith.constant dense<0.000000e+00> : vector<2x8xf32>
    %49 = vector.multi_reduction <add>, %48, %cst_16 [2] : vector<2x8x8xf32> to vector<2x8xf32>
    %50 = vector.shape_cast %49 : vector<2x8xf32> to vector<2x8x1xf32>
    %51 = tpu.reciprocal %50 {approx = true} : vector<2x8x1xf32> -> vector<2x8x1xf32>
    %52 = vector.broadcast %51 : vector<2x8x1xf32> to vector<2x8x8xf32>
    %53 = arith.mulf %48, %52 : vector<2x8x8xf32>
    %54 = arith.truncf %53 : vector<2x8x8xf32> to vector<2x8x8xbf16>
    "tpu.trace_start"() <{level = 10 : i32, message = "gqk,gke->gqe"}> : () -> ()
    %cst_17 = arith.constant dense<0.000000e+00> : vector<2x8x8xf32>
    %55 = tpu.matmul %54, %42, %cst_17 {dimension_numbers = #tpu.dot_dimension_numbers<[2], [1], [1], [2], [0, 0, 0, 1, 1, 2], [0], [0]>} : vector<2x8x8xbf16>, vector<2x8x8xbf16>, vector<2x8x8xf32> -> vector<2x8x8xf32>
    "tpu.trace_stop"() : () -> ()
    %56 = vector.shape_cast %55 : vector<2x8x8xf32> to vector<16x8xf32>
    %57 = arith.truncf %56 : vector<16x8xf32> to vector<16x8xbf16>
    %c8 = arith.constant 8 : index
    %c0_18 = arith.constant 0 : index
    %58 = vector.load %arg5[%c8, %c0_18] : memref<32x32xbf16, #tpu.memory_space<vmem>>, vector<8x32xbf16>
    %cst_19 = arith.constant dense<0.000000e+00> : vector<16x32xf32>
    %59 = tpu.matmul %57, %58, %cst_19 {dimension_numbers = #tpu.dot_dimension_numbers<[1], [0], [0], [1], [0, 0, 1, 1], [], []>} : vector<16x8xbf16>, vector<8x32xbf16>, vector<16x32xf32> -> vector<16x32xf32>
    %60 = arith.addf %36, %59 : vector<16x32xf32>
    %61 = vector.extract_strided_slice %13 {offsets = [0, 16], sizes = [16, 8], strides = [1, 1]} : vector<16x96xbf16> to vector<16x8xbf16>
    %62 = vector.shape_cast %61 : vector<16x8xbf16> to vector<2x8x8xbf16>
    %63 = vector.extract_strided_slice %13 {offsets = [0, 48], sizes = [16, 8], strides = [1, 1]} : vector<16x96xbf16> to vector<16x8xbf16>
    %64 = vector.shape_cast %63 : vector<16x8xbf16> to vector<2x8x8xbf16>
    %65 = vector.extract_strided_slice %13 {offsets = [0, 80], sizes = [16, 8], strides = [1, 1]} : vector<16x96xbf16> to vector<16x8xbf16>
    %66 = vector.shape_cast %65 : vector<16x8xbf16> to vector<2x8x8xbf16>
    "tpu.trace_start"() <{level = 10 : i32, message = "gqe,gke->gqk"}> : () -> ()
    %cst_20 = arith.constant dense<0.000000e+00> : vector<2x8x8xf32>
    %67 = tpu.matmul %62, %64, %cst_20 {dimension_numbers = #tpu.dot_dimension_numbers<[2], [2], [1], [1], [0, 0, 0, 1, 1, 1], [0], [0]>} : vector<2x8x8xbf16>, vector<2x8x8xbf16>, vector<2x8x8xf32> -> vector<2x8x8xf32>
    "tpu.trace_stop"() : () -> ()
    %cst_21 = arith.constant dense<0xFF800000> : vector<2x8xf32>
    %68 = vector.multi_reduction <maximumf>, %67, %cst_21 [2] : vector<2x8x8xf32> to vector<2x8xf32>
    %69 = vector.shape_cast %68 : vector<2x8xf32> to vector<2x8x1xf32>
    %70 = vector.broadcast %69 : vector<2x8x1xf32> to vector<2x8x8xf32>
    %71 = arith.subf %67, %70 : vector<2x8x8xf32>
    %72 = math.exp %71 : vector<2x8x8xf32>
    %cst_22 = arith.constant dense<0.000000e+00> : vector<2x8xf32>
    %73 = vector.multi_reduction <add>, %72, %cst_22 [2] : vector<2x8x8xf32> to vector<2x8xf32>
    %74 = vector.shape_cast %73 : vector<2x8xf32> to vector<2x8x1xf32>
    %75 = tpu.reciprocal %74 {approx = true} : vector<2x8x1xf32> -> vector<2x8x1xf32>
    %76 = vector.broadcast %75 : vector<2x8x1xf32> to vector<2x8x8xf32>
    %77 = arith.mulf %72, %76 : vector<2x8x8xf32>
    %78 = arith.truncf %77 : vector<2x8x8xf32> to vector<2x8x8xbf16>
    "tpu.trace_start"() <{level = 10 : i32, message = "gqk,gke->gqe"}> : () -> ()
    %cst_23 = arith.constant dense<0.000000e+00> : vector<2x8x8xf32>
    %79 = tpu.matmul %78, %66, %cst_23 {dimension_numbers = #tpu.dot_dimension_numbers<[2], [1], [1], [2], [0, 0, 0, 1, 1, 2], [0], [0]>} : vector<2x8x8xbf16>, vector<2x8x8xbf16>, vector<2x8x8xf32> -> vector<2x8x8xf32>
    "tpu.trace_stop"() : () -> ()
    %80 = vector.shape_cast %79 : vector<2x8x8xf32> to vector<16x8xf32>
    %81 = arith.truncf %80 : vector<16x8xf32> to vector<16x8xbf16>
    %c16 = arith.constant 16 : index
    %c0_24 = arith.constant 0 : index
    %82 = vector.load %arg5[%c16, %c0_24] : memref<32x32xbf16, #tpu.memory_space<vmem>>, vector<8x32xbf16>
    %cst_25 = arith.constant dense<0.000000e+00> : vector<16x32xf32>
    %83 = tpu.matmul %81, %82, %cst_25 {dimension_numbers = #tpu.dot_dimension_numbers<[1], [0], [0], [1], [0, 0, 1, 1], [], []>} : vector<16x8xbf16>, vector<8x32xbf16>, vector<16x32xf32> -> vector<16x32xf32>
    %84 = arith.addf %60, %83 : vector<16x32xf32>
    %85 = vector.extract_strided_slice %13 {offsets = [0, 24], sizes = [16, 8], strides = [1, 1]} : vector<16x96xbf16> to vector<16x8xbf16>
    %86 = vector.shape_cast %85 : vector<16x8xbf16> to vector<2x8x8xbf16>
    %87 = vector.extract_strided_slice %13 {offsets = [0, 56], sizes = [16, 8], strides = [1, 1]} : vector<16x96xbf16> to vector<16x8xbf16>
    %88 = vector.shape_cast %87 : vector<16x8xbf16> to vector<2x8x8xbf16>
    %89 = vector.extract_strided_slice %13 {offsets = [0, 88], sizes = [16, 8], strides = [1, 1]} : vector<16x96xbf16> to vector<16x8xbf16>
    %90 = vector.shape_cast %89 : vector<16x8xbf16> to vector<2x8x8xbf16>
    "tpu.trace_start"() <{level = 10 : i32, message = "gqe,gke->gqk"}> : () -> ()
    %cst_26 = arith.constant dense<0.000000e+00> : vector<2x8x8xf32>
    %91 = tpu.matmul %86, %88, %cst_26 {dimension_numbers = #tpu.dot_dimension_numbers<[2], [2], [1], [1], [0, 0, 0, 1, 1, 1], [0], [0]>} : vector<2x8x8xbf16>, vector<2x8x8xbf16>, vector<2x8x8xf32> -> vector<2x8x8xf32>
    "tpu.trace_stop"() : () -> ()
    %cst_27 = arith.constant dense<0xFF800000> : vector<2x8xf32>
    %92 = vector.multi_reduction <maximumf>, %91, %cst_27 [2] : vector<2x8x8xf32> to vector<2x8xf32>
    %93 = vector.shape_cast %92 : vector<2x8xf32> to vector<2x8x1xf32>
    %94 = vector.broadcast %93 : vector<2x8x1xf32> to vector<2x8x8xf32>
    %95 = arith.subf %91, %94 : vector<2x8x8xf32>
    %96 = math.exp %95 : vector<2x8x8xf32>
    %cst_28 = arith.constant dense<0.000000e+00> : vector<2x8xf32>
    %97 = vector.multi_reduction <add>, %96, %cst_28 [2] : vector<2x8x8xf32> to vector<2x8xf32>
    %98 = vector.shape_cast %97 : vector<2x8xf32> to vector<2x8x1xf32>
    %99 = tpu.reciprocal %98 {approx = true} : vector<2x8x1xf32> -> vector<2x8x1xf32>
    %100 = vector.broadcast %99 : vector<2x8x1xf32> to vector<2x8x8xf32>
    %101 = arith.mulf %96, %100 : vector<2x8x8xf32>
    %102 = arith.truncf %101 : vector<2x8x8xf32> to vector<2x8x8xbf16>
    "tpu.trace_start"() <{level = 10 : i32, message = "gqk,gke->gqe"}> : () -> ()
    %cst_29 = arith.constant dense<0.000000e+00> : vector<2x8x8xf32>
    %103 = tpu.matmul %102, %90, %cst_29 {dimension_numbers = #tpu.dot_dimension_numbers<[2], [1], [1], [2], [0, 0, 0, 1, 1, 2], [0], [0]>} : vector<2x8x8xbf16>, vector<2x8x8xbf16>, vector<2x8x8xf32> -> vector<2x8x8xf32>
    "tpu.trace_stop"() : () -> ()
    %104 = vector.shape_cast %103 : vector<2x8x8xf32> to vector<16x8xf32>
    %105 = arith.truncf %104 : vector<16x8xf32> to vector<16x8xbf16>
    %c24 = arith.constant 24 : index
    %c0_30 = arith.constant 0 : index
    %106 = vector.load %arg5[%c24, %c0_30] : memref<32x32xbf16, #tpu.memory_space<vmem>>, vector<8x32xbf16>
    %cst_31 = arith.constant dense<0.000000e+00> : vector<16x32xf32>
    %107 = tpu.matmul %105, %106, %cst_31 {dimension_numbers = #tpu.dot_dimension_numbers<[1], [0], [0], [1], [0, 0, 1, 1], [], []>} : vector<16x8xbf16>, vector<8x32xbf16>, vector<16x32xf32> -> vector<16x32xf32>
    %108 = arith.addf %84, %107 : vector<16x32xf32>
    %c0_32 = arith.constant 0 : index
    %c0_33 = arith.constant 0 : index
    %109 = vector.load %arg6[%c0_32, %c0_33] : memref<1x32xf32, #tpu.memory_space<vmem>>, vector<1x32xf32>
    %110 = vector.broadcast %109 : vector<1x32xf32> to vector<16x32xf32>
    %111 = arith.addf %108, %110 : vector<16x32xf32>
    %112 = arith.addf %6, %111 : vector<16x32xf32>
    %c0_34 = arith.constant 0 : index
    %c0_35 = arith.constant 0 : index
    %113 = vector.load %arg7[%c0_34, %c0_35] : memref<1x32xf32, #tpu.memory_space<vmem>>, vector<1x32xf32>
    %c0_36 = arith.constant 0 : index
    %c0_37 = arith.constant 0 : index
    %114 = vector.load %arg8[%c0_36, %c0_37] : memref<1x32xf32, #tpu.memory_space<vmem>>, vector<1x32xf32>
    %cst_38 = arith.constant dense<0.000000e+00> : vector<16xf32>
    %115 = vector.multi_reduction <add>, %112, %cst_38 [1] : vector<16x32xf32> to vector<16xf32>
    %116 = vector.shape_cast %115 : vector<16xf32> to vector<16x1xf32>
    %cst_39 = arith.constant 3.200000e+01 : f32
    %117 = vector.broadcast %cst_39 : f32 to vector<16x1xf32>
    %118 = arith.divf %116, %117 : vector<16x1xf32>
    %119 = vector.broadcast %118 : vector<16x1xf32> to vector<16x32xf32>
    %120 = arith.subf %112, %119 : vector<16x32xf32>
    %121 = arith.mulf %120, %120 : vector<16x32xf32>
    %cst_40 = arith.constant dense<0.000000e+00> : vector<16xf32>
    %122 = vector.multi_reduction <add>, %121, %cst_40 [1] : vector<16x32xf32> to vector<16xf32>
    %123 = vector.shape_cast %122 : vector<16xf32> to vector<16x1xf32>
    %cst_41 = arith.constant 3.200000e+01 : f32
    %124 = vector.broadcast %cst_41 : f32 to vector<16x1xf32>
    %125 = arith.divf %123, %124 : vector<16x1xf32>
    %126 = vector.broadcast %118 : vector<16x1xf32> to vector<16x32xf32>
    %127 = arith.subf %112, %126 : vector<16x32xf32>
    %cst_42 = arith.constant 9.99999974E-6 : f32
    %128 = vector.broadcast %cst_42 : f32 to vector<16x1xf32>
    %129 = arith.addf %125, %128 : vector<16x1xf32>
    %130 = math.rsqrt %129 : vector<16x1xf32>
    %131 = vector.broadcast %130 : vector<16x1xf32> to vector<16x32xf32>
    %132 = arith.mulf %127, %131 : vector<16x32xf32>
    %133 = vector.broadcast %113 : vector<1x32xf32> to vector<16x32xf32>
    %134 = arith.mulf %132, %133 : vector<16x32xf32>
    %135 = vector.broadcast %114 : vector<1x32xf32> to vector<16x32xf32>
    %136 = arith.addf %134, %135 : vector<16x32xf32>
    %137 = arith.truncf %136 : vector<16x32xf32> to vector<16x32xbf16>
    %c0_43 = arith.constant 0 : index
    %c0_44 = arith.constant 0 : index
    %138 = vector.load %arg9[%c0_43, %c0_44] : memref<32x32xbf16, #tpu.memory_space<vmem>>, vector<32x32xbf16>
    %cst_45 = arith.constant dense<0.000000e+00> : vector<16x32xf32>
    %139 = tpu.matmul %137, %138, %cst_45 {dimension_numbers = #tpu.dot_dimension_numbers<[1], [0], [0], [1], [0, 0, 1, 1], [], []>} : vector<16x32xbf16>, vector<32x32xbf16>, vector<16x32xf32> -> vector<16x32xf32>
    %c0_46 = arith.constant 0 : index
    %c0_47 = arith.constant 0 : index
    %140 = vector.load %arg10[%c0_46, %c0_47] : memref<1x32xf32, #tpu.memory_space<vmem>>, vector<1x32xf32>
    %141 = vector.broadcast %140 : vector<1x32xf32> to vector<16x32xf32>
    %142 = arith.addf %139, %141 : vector<16x32xf32>
    %cst_48 = arith.constant 0.000000e+00 : f32
    %143 = vector.broadcast %cst_48 : f32 to vector<16x32xf32>
    %144 = arith.maximumf %142, %143 : vector<16x32xf32>
    %145 = arith.truncf %144 : vector<16x32xf32> to vector<16x32xbf16>
    %c0_49 = arith.constant 0 : index
    %c0_50 = arith.constant 0 : index
    %146 = vector.load %arg11[%c0_49, %c0_50] : memref<32x32xbf16, #tpu.memory_space<vmem>>, vector<32x32xbf16>
    %cst_51 = arith.constant dense<0.000000e+00> : vector<16x32xf32>
    %147 = tpu.matmul %145, %146, %cst_51 {dimension_numbers = #tpu.dot_dimension_numbers<[1], [0], [0], [1], [0, 0, 1, 1], [], []>} : vector<16x32xbf16>, vector<32x32xbf16>, vector<16x32xf32> -> vector<16x32xf32>
    %c0_52 = arith.constant 0 : index
    %c0_53 = arith.constant 0 : index
    %148 = vector.load %arg12[%c0_52, %c0_53] : memref<1x32xf32, #tpu.memory_space<vmem>>, vector<1x32xf32>
    %149 = vector.broadcast %148 : vector<1x32xf32> to vector<16x32xf32>
    %150 = arith.addf %147, %149 : vector<16x32xf32>
    %151 = arith.addf %136, %150 : vector<16x32xf32>
    %c0_54 = arith.constant 0 : index
    %c0_55 = arith.constant 0 : index
    %152 = vector.load %arg13[%c0_54, %c0_55] : memref<1x32xf32, #tpu.memory_space<vmem>>, vector<1x32xf32>
    %c0_56 = arith.constant 0 : index
    %c0_57 = arith.constant 0 : index
    %153 = vector.load %arg14[%c0_56, %c0_57] : memref<1x32xf32, #tpu.memory_space<vmem>>, vector<1x32xf32>
    %cst_58 = arith.constant dense<0.000000e+00> : vector<16xf32>
    %154 = vector.multi_reduction <add>, %151, %cst_58 [1] : vector<16x32xf32> to vector<16xf32>
    %155 = vector.shape_cast %154 : vector<16xf32> to vector<16x1xf32>
    %cst_59 = arith.constant 3.200000e+01 : f32
    %156 = vector.broadcast %cst_59 : f32 to vector<16x1xf32>
    %157 = arith.divf %155, %156 : vector<16x1xf32>
    %158 = vector.broadcast %157 : vector<16x1xf32> to vector<16x32xf32>
    %159 = arith.subf %151, %158 : vector<16x32xf32>
    %160 = arith.mulf %159, %159 : vector<16x32xf32>
    %cst_60 = arith.constant dense<0.000000e+00> : vector<16xf32>
    %161 = vector.multi_reduction <add>, %160, %cst_60 [1] : vector<16x32xf32> to vector<16xf32>
    %162 = vector.shape_cast %161 : vector<16xf32> to vector<16x1xf32>
    %cst_61 = arith.constant 3.200000e+01 : f32
    %163 = vector.broadcast %cst_61 : f32 to vector<16x1xf32>
    %164 = arith.divf %162, %163 : vector<16x1xf32>
    %165 = vector.broadcast %157 : vector<16x1xf32> to vector<16x32xf32>
    %166 = arith.subf %151, %165 : vector<16x32xf32>
    %cst_62 = arith.constant 9.99999974E-6 : f32
    %167 = vector.broadcast %cst_62 : f32 to vector<16x1xf32>
    %168 = arith.addf %164, %167 : vector<16x1xf32>
    %169 = math.rsqrt %168 : vector<16x1xf32>
    %170 = vector.broadcast %169 : vector<16x1xf32> to vector<16x32xf32>
    %171 = arith.mulf %166, %170 : vector<16x32xf32>
    %172 = vector.broadcast %152 : vector<1x32xf32> to vector<16x32xf32>
    %173 = arith.mulf %171, %172 : vector<16x32xf32>
    %174 = vector.broadcast %153 : vector<1x32xf32> to vector<16x32xf32>
    %175 = arith.addf %173, %174 : vector<16x32xf32>
    %c0_63 = arith.constant 0 : index
    %c0_64 = arith.constant 0 : index
    %176 = vector.load %arg15[%c0_63, %c0_64] : memref<16x32xf32, #tpu.memory_space<vmem>>, vector<16x32xf32>
    tpu.vector_store %arg15[%c0_63, %c0_64], %175 {strides = array<i32>} : memref<16x32xf32, #tpu.memory_space<vmem>>, vector<16x32xf32>,
    return
  }
  func.func @transform_0(%arg0: i32) -> (i32, i32) {
    %c0_i32 = arith.constant 0 : i32
    %c0_i32_0 = arith.constant 0 : i32
    return %arg0, %c0_i32 : i32, i32
  }
  func.func @transform_1(%arg0: i32) -> (i32, i32) {
    %c0_i32 = arith.constant 0 : i32
    %c0_i32_0 = arith.constant 0 : i32
    %c0_i32_1 = arith.constant 0 : i32
    return %c0_i32, %c0_i32_0 : i32, i32
  }
  func.func @transform_2(%arg0: i32) -> (i32, i32) {
    %c0_i32 = arith.constant 0 : i32
    %c0_i32_0 = arith.constant 0 : i32
    %c0_i32_1 = arith.constant 0 : i32
    return %c0_i32, %c0_i32_0 : i32, i32
  }
  func.func @transform_3(%arg0: i32) -> (i32, i32) {
    %c0_i32 = arith.constant 0 : i32
    %c0_i32_0 = arith.constant 0 : i32
    %c0_i32_1 = arith.constant 0 : i32
    return %c0_i32, %c0_i32_0 : i32, i32
  }
  func.func @transform_4(%arg0: i32) -> (i32, i32) {
    %c0_i32 = arith.constant 0 : i32
    %c0_i32_0 = arith.constant 0 : i32
    %c0_i32_1 = arith.constant 0 : i32
    return %c0_i32, %c0_i32_0 : i32, i32
  }
  func.func @transform_5(%arg0: i32) -> (i32, i32) {
    %c0_i32 = arith.constant 0 : i32
    %c0_i32_0 = arith.constant 0 : i32
    %c0_i32_1 = arith.constant 0 : i32
    return %c0_i32, %c0_i32_0 : i32, i32
  }
  func.func @transform_6(%arg0: i32) -> (i32, i32) {
    %c0_i32 = arith.constant 0 : i32
    %c0_i32_0 = arith.constant 0 : i32
    %c0_i32_1 = arith.constant 0 : i32
    return %c0_i32, %c0_i32_0 : i32, i32
  }
  func.func @transform_7(%arg0: i32) -> (i32, i32) {
    %c0_i32 = arith.constant 0 : i32
    %c0_i32_0 = arith.constant 0 : i32
    %c0_i32_1 = arith.constant 0 : i32
    return %c0_i32, %c0_i32_0 : i32, i32
  }
  func.func @transform_8(%arg0: i32) -> (i32, i32) {
    %c0_i32 = arith.constant 0 : i32
    %c0_i32_0 = arith.constant 0 : i32
    %c0_i32_1 = arith.constant 0 : i32
    return %c0_i32, %c0_i32_0 : i32, i32
  }
  func.func @transform_9(%arg0: i32) -> (i32, i32) {
    %c0_i32 = arith.constant 0 : i32
    %c0_i32_0 = arith.constant 0 : i32
    %c0_i32_1 = arith.constant 0 : i32
    return %c0_i32, %c0_i32_0 : i32, i32
  }
  func.func @transform_10(%arg0: i32) -> (i32, i32) {
    %c0_i32 = arith.constant 0 : i32
    %c0_i32_0 = arith.constant 0 : i32
    %c0_i32_1 = arith.constant 0 : i32
    return %c0_i32, %c0_i32_0 : i32, i32
  }
  func.func @transform_11(%arg0: i32) -> (i32, i32) {
    %c0_i32 = arith.constant 0 : i32
    %c0_i32_0 = arith.constant 0 : i32
    %c0_i32_1 = arith.constant 0 : i32
    return %c0_i32, %c0_i32_0 : i32, i32
  }
  func.func @transform_12(%arg0: i32) -> (i32, i32) {
    %c0_i32 = arith.constant 0 : i32
    %c0_i32_0 = arith.constant 0 : i32
    %c0_i32_1 = arith.constant 0 : i32
    return %c0_i32, %c0_i32_0 : i32, i32
  }
  func.func @transform_13(%arg0: i32) -> (i32, i32) {
    %c0_i32 = arith.constant 0 : i32
    %c0_i32_0 = arith.constant 0 : i32
    %c0_i32_1 = arith.constant 0 : i32
    return %c0_i32, %c0_i32_0 : i32, i32
  }
  func.func @transform_14(%arg0: i32) -> (i32, i32) {
    %c0_i32 = arith.constant 0 : i32
    %c0_i32_0 = arith.constant 0 : i32
    return %arg0, %c0_i32 : i32, i32
  }
}

</mosaic_0001>

<llo_original>
// kernel: tpu_custom_call.1
$region0: #{tpu_custom_call.1}
  #allocation0 [shape = 'u32[]', space=smem, size = 0x4, offset = 0x4, fixed_abs, tag = 'smem constant byte address 0x4 - core index']
  #allocation1 [shape = 'u32[72,128]{1,0:T(1,128)}', space=vmem, size = 0x9000, scoped, tag = 'internal scratch']
  %s0 = inlined_call_operand.vmem [shape: f32[64,32], index: 0, kind: input, shape index: {}]
  %s1 = inlined_call_operand.vmem [shape: f32[8,32], index: 1, kind: input, shape index: {}]
  %s2 = inlined_call_operand.vmem [shape: bf16[32,96], index: 2, kind: input, shape index: {}]
  %s3 = inlined_call_operand.vmem [shape: f32[1,96], index: 3, kind: input, shape index: {}]
  %s4 = inlined_call_operand.vmem [shape: bf16[32,32], index: 4, kind: input, shape index: {}]
  %s5 = inlined_call_operand.vmem [shape: f32[1,32], index: 5, kind: input, shape index: {}]
  %s6 = inlined_call_operand.vmem [shape: f32[1,32], index: 6, kind: input, shape index: {}]
  %s7 = inlined_call_operand.vmem [shape: f32[1,32], index: 7, kind: input, shape index: {}]
  %s8 = inlined_call_operand.vmem [shape: bf16[32,32], index: 8, kind: input, shape index: {}]
  %s9 = inlined_call_operand.vmem [shape: f32[1,32], index: 9, kind: input, shape index: {}]
  %s10 = inlined_call_operand.vmem [shape: bf16[32,32], index: 10, kind: input, shape index: {}]
  %s11 = inlined_call_operand.vmem [shape: f32[1,32], index: 11, kind: input, shape index: {}]
  %s12 = inlined_call_operand.vmem [shape: f32[1,32], index: 12, kind: input, shape index: {}]
  %s13 = inlined_call_operand.vmem [shape: f32[1,32], index: 13, kind: input, shape index: {}]
  %s14 = inlined_call_operand.vmem [shape: f32[64,32], index: 14, kind: output, shape index: {}]
  %s15 = sld [smem:[#allocation0]]
  $region89: #{tpu_custom_call.1} parent=0
    _
  %s17 = ssub.s32 1, %s15
  %s18 = scalar_select 0, %s17, %s15
  loop: start=0, step=1, limit=6
  $region2: #{tpu_custom_call.1} parent=0 // loop_pre_header
    _
  $region3: #{tpu_custom_call.1} parent=0 // loop_header
    %s20 = sphi 0, %s24
    %p21 = scmp.ge.s32.totalorder %s20, 6
    %s30 = sphi 0, %s32
    %s33 = sphi 0, %s30
    %s34 = sphi 0, %s33
    %s50 = sphi 0, %s34
    %s54 = sphi 0, %s54
    %s56 = sphi 0, %s54
    %s57 = sphi 0, %s56
    %s71 = sphi 0, %s57
    %s75 = sphi 0, %s75
    %s77 = sphi 0, %s75
    %s78 = sphi 0, %s77
    %s92 = sphi 0, %s78
    %s96 = sphi 0, %s96
    %s98 = sphi 0, %s96
    %s99 = sphi 0, %s98
    %s113 = sphi 0, %s99
    %s117 = sphi 0, %s117
    %s119 = sphi 0, %s117
    %s120 = sphi 0, %s119
    %s134 = sphi 0, %s120
    %s138 = sphi 0, %s138
    %s140 = sphi 0, %s138
    %s141 = sphi 0, %s140
    %s155 = sphi 0, %s141
    %s159 = sphi 0, %s159
    %s161 = sphi 0, %s159
    %s162 = sphi 0, %s161
    %s176 = sphi 0, %s162
    %s180 = sphi 0, %s180
    %s182 = sphi 0, %s180
    %s183 = sphi 0, %s182
    %s197 = sphi 0, %s183
    %s201 = sphi 0, %s201
    %s203 = sphi 0, %s201
    %s204 = sphi 0, %s203
    %s218 = sphi 0, %s204
    %s222 = sphi 0, %s222
    %s224 = sphi 0, %s222
    %s225 = sphi 0, %s224
    %s239 = sphi 0, %s225
    %s243 = sphi 0, %s243
    %s245 = sphi 0, %s243
    %s246 = sphi 0, %s245
    %s260 = sphi 0, %s246
    %s264 = sphi 0, %s264
    %s266 = sphi 0, %s264
    %s267 = sphi 0, %s266
    %s281 = sphi 0, %s267
    %s285 = sphi 0, %s285
    %s287 = sphi 0, %s285
    %s288 = sphi 0, %s287
    %s302 = sphi 0, %s288
    %s306 = sphi 0, %s306
    %s308 = sphi 0, %s306
    %s309 = sphi 0, %s308
    %s323 = sphi 0, %s309
    %s329 = sphi 0, %s331
    %s332 = sphi 0, %s329
    %s333 = sphi 0, %s332
    %s349 = sphi 0, %s333
  $region4: #{tpu_custom_call.1} parent=0 // loop_header_branch
    %23 = sbr.rel (%p21) target = $region8
  $region5: #{tpu_custom_call.1} parent=0 // loop_body
    %s25 = ssub.s32 %s20, 1
    %s26 = ssub.s32 %s20, 2
    %s27 = sadd.s32 %s20, 1
    %s28 = ssub.s32 %s20, %s27
    %p29 = scmp.eq.s32.totalorder %s28, 0
    %s31 = sadd.s32 %s30, 1
    %s32 = scalar_select %p29, %s30, %s31
    %p35 = pneg %p29
    %p36 = scmp.eq.s32.totalorder %s20, 3
    %p37 = por %p35, %p36
    %p38 = scmp.ne.s32.totalorder %s30, %s33
    %p39 = scmp.eq.s32.totalorder %s20, 0
    %p40 = por %p38, %p39
    %p41 = scmp.ne.s32.totalorder %s30, %s33
    %p42 = scmp.eq.s32.totalorder %s25, 3
    %p43 = por %p41, %p42
    %p44 = scmp.ne.s32.totalorder %s33, %s34
    %p45 = scmp.eq.s32.totalorder %s25, 0
    %p46 = por %p44, %p45
    %p47 = scmp.ne.s32.totalorder %s33, %s34
    %p48 = scmp.eq.s32.totalorder %s26, 3
    %p49 = por %p47, %p48
    %p51 = scmp.ne.s32.totalorder %s34, %s50
    %p52 = scmp.eq.s32.totalorder %s26, 0
    %p53 = por %p51, %p52
    %s55 = sadd.s32 %s54, 1
    %p58 = scmp.eq.s32.totalorder %s20, 3
    %p59 = scmp.ne.s32.totalorder %s54, %s56
    %p60 = scmp.eq.s32.totalorder %s20, 0
    %p61 = por %p59, %p60
    %p62 = scmp.ne.s32.totalorder %s54, %s56
    %p63 = scmp.eq.s32.totalorder %s25, 3
    %p64 = por %p62, %p63
    %p65 = scmp.ne.s32.totalorder %s56, %s57
    %p66 = scmp.eq.s32.totalorder %s25, 0
    %p67 = por %p65, %p66
    %p68 = scmp.ne.s32.totalorder %s56, %s57
    %p69 = scmp.eq.s32.totalorder %s26, 3
    %p70 = por %p68, %p69
    %p72 = scmp.ne.s32.totalorder %s57, %s71
    %p73 = scmp.eq.s32.totalorder %s26, 0
    %p74 = por %p72, %p73
    %s76 = sadd.s32 %s75, 1
    %p79 = scmp.eq.s32.totalorder %s20, 3
    %p80 = scmp.ne.s32.totalorder %s75, %s77
    %p81 = scmp.eq.s32.totalorder %s20, 0
    %p82 = por %p80, %p81
    %p83 = scmp.ne.s32.totalorder %s75, %s77
    %p84 = scmp.eq.s32.totalorder %s25, 3
    %p85 = por %p83, %p84
    %p86 = scmp.ne.s32.totalorder %s77, %s78
    %p87 = scmp.eq.s32.totalorder %s25, 0
    %p88 = por %p86, %p87
    %p89 = scmp.ne.s32.totalorder %s77, %s78
    %p90 = scmp.eq.s32.totalorder %s26, 3
    %p91 = por %p89, %p90
    %p93 = scmp.ne.s32.totalorder %s78, %s92
    %p94 = scmp.eq.s32.totalorder %s26, 0
    %p95 = por %p93, %p94
    %s97 = sadd.s32 %s96, 1
    %p100 = scmp.eq.s32.totalorder %s20, 3
    %p101 = scmp.ne.s32.totalorder %s96, %s98
    %p102 = scmp.eq.s32.totalorder %s20, 0
    %p103 = por %p101, %p102
    %p104 = scmp.ne.s32.totalorder %s96, %s98
    %p105 = scmp.eq.s32.totalorder %s25, 3
    %p106 = por %p104, %p105
    %p107 = scmp.ne.s32.totalorder %s98, %s99
    %p108 = scmp.eq.s32.totalorder %s25, 0
    %p109 = por %p107, %p108
    %p110 = scmp.ne.s32.totalorder %s98, %s99
    %p111 = scmp.eq.s32.totalorder %s26, 3
    %p112 = por %p110, %p111
    %p114 = scmp.ne.s32.totalorder %s99, %s113
    %p115 = scmp.eq.s32.totalorder %s26, 0
    %p116 = por %p114, %p115
    %s118 = sadd.s32 %s117, 1
    %p121 = scmp.eq.s32.totalorder %s20, 3
    %p122 = scmp.ne.s32.totalorder %s117, %s119
    %p123 = scmp.eq.s32.totalorder %s20, 0
    %p124 = por %p122, %p123
    %p125 = scmp.ne.s32.totalorder %s117, %s119
    %p126 = scmp.eq.s32.totalorder %s25, 3
    %p127 = por %p125, %p126
    %p128 = scmp.ne.s32.totalorder %s119, %s120
    %p129 = scmp.eq.s32.totalorder %s25, 0
    %p130 = por %p128, %p129
    %p131 = scmp.ne.s32.totalorder %s119, %s120
    %p132 = scmp.eq.s32.totalorder %s26, 3
    %p133 = por %p131, %p132
    %p135 = scmp.ne.s32.totalorder %s120, %s134
    %p136 = scmp.eq.s32.totalorder %s26, 0
    %p137 = por %p135, %p136
    %s139 = sadd.s32 %s138, 1
    %p142 = scmp.eq.s32.totalorder %s20, 3
    %p143 = scmp.ne.s32.totalorder %s138, %s140
    %p144 = scmp.eq.s32.totalorder %s20, 0
    %p145 = por %p143, %p144
    %p146 = scmp.ne.s32.totalorder %s138, %s140
    %p147 = scmp.eq.s32.totalorder %s25, 3
    %p148 = por %p146, %p147
    %p149 = scmp.ne.s32.totalorder %s140, %s141
    %p150 = scmp.eq.s32.totalorder %s25, 0
    %p151 = por %p149, %p150
    %p152 = scmp.ne.s32.totalorder %s140, %s141
    %p153 = scmp.eq.s32.totalorder %s26, 3
    %p154 = por %p152, %p153
    %p156 = scmp.ne.s32.totalorder %s141, %s155
    %p157 = scmp.eq.s32.totalorder %s26, 0
    %p158 = por %p156, %p157
    %s160 = sadd.s32 %s159, 1
    %p163 = scmp.eq.s32.totalorder %s20, 3
    %p164 = scmp.ne.s32.totalorder %s159, %s161
    %p165 = scmp.eq.s32.totalorder %s20, 0
    %p166 = por %p164, %p165
    %p167 = scmp.ne.s32.totalorder %s159, %s161
    %p168 = scmp.eq.s32.totalorder %s25, 3
    %p169 = por %p167, %p168
    %p170 = scmp.ne.s32.totalorder %s161, %s162
    %p171 = scmp.eq.s32.totalorder %s25, 0
    %p172 = por %p170, %p171
    %p173 = scmp.ne.s32.totalorder %s161, %s162
    %p174 = scmp.eq.s32.totalorder %s26, 3
    %p175 = por %p173, %p174
    %p177 = scmp.ne.s32.totalorder %s162, %s176
    %p178 = scmp.eq.s32.totalorder %s26, 0
    %p179 = por %p177, %p178
    %s181 = sadd.s32 %s180, 1
    %p184 = scmp.eq.s32.totalorder %s20, 3
    %p185 = scmp.ne.s32.totalorder %s180, %s182
    %p186 = scmp.eq.s32.totalorder %s20, 0
    %p187 = por %p185, %p186
    %p188 = scmp.ne.s32.totalorder %s180, %s182
    %p189 = scmp.eq.s32.totalorder %s25, 3
    %p190 = por %p188, %p189
    %p191 = scmp.ne.s32.totalorder %s182, %s183
    %p192 = scmp.eq.s32.totalorder %s25, 0
    %p193 = por %p191, %p192
    %p194 = scmp.ne.s32.totalorder %s182, %s183
    %p195 = scmp.eq.s32.totalorder %s26, 3
    %p196 = por %p194, %p195
    %p198 = scmp.ne.s32.totalorder %s183, %s197
    %p199 = scmp.eq.s32.totalorder %s26, 0
    %p200 = por %p198, %p199
    %s202 = sadd.s32 %s201, 1
    %p205 = scmp.eq.s32.totalorder %s20, 3
    %p206 = scmp.ne.s32.totalorder %s201, %s203
    %p207 = scmp.eq.s32.totalorder %s20, 0
    %p208 = por %p206, %p207
    %p209 = scmp.ne.s32.totalorder %s201, %s203
    %p210 = scmp.eq.s32.totalorder %s25, 3
    %p211 = por %p209, %p210
    %p212 = scmp.ne.s32.totalorder %s203, %s204
    %p213 = scmp.eq.s32.totalorder %s25, 0
    %p214 = por %p212, %p213
    %p215 = scmp.ne.s32.totalorder %s203, %s204
    %p216 = scmp.eq.s32.totalorder %s26, 3
    %p217 = por %p215, %p216
    %p219 = scmp.ne.s32.totalorder %s204, %s218
    %p220 = scmp.eq.s32.totalorder %s26, 0
    %p221 = por %p219, %p220
    %s223 = sadd.s32 %s222, 1
    %p226 = scmp.eq.s32.totalorder %s20, 3
    %p227 = scmp.ne.s32.totalorder %s222, %s224
    %p228 = scmp.eq.s32.totalorder %s20, 0
    %p229 = por %p227, %p228
    %p230 = scmp.ne.s32.totalorder %s222, %s224
    %p231 = scmp.eq.s32.totalorder %s25, 3
    %p232 = por %p230, %p231
    %p233 = scmp.ne.s32.totalorder %s224, %s225
    %p234 = scmp.eq.s32.totalorder %s25, 0
    %p235 = por %p233, %p234
    %p236 = scmp.ne.s32.totalorder %s224, %s225
    %p237 = scmp.eq.s32.totalorder %s26, 3
    %p238 = por %p236, %p237
    %p240 = scmp.ne.s32.totalorder %s225, %s239
    %p241 = scmp.eq.s32.totalorder %s26, 0
    %p242 = por %p240, %p241
    %s244 = sadd.s32 %s243, 1
    %p247 = scmp.eq.s32.totalorder %s20, 3
    %p248 = scmp.ne.s32.totalorder %s243, %s245
    %p249 = scmp.eq.s32.totalorder %s20, 0
    %p250 = por %p248, %p249
    %p251 = scmp.ne.s32.totalorder %s243, %s245
    %p252 = scmp.eq.s32.totalorder %s25, 3
    %p253 = por %p251, %p252
    %p254 = scmp.ne.s32.totalorder %s245, %s246
    %p255 = scmp.eq.s32.totalorder %s25, 0
    %p256 = por %p254, %p255
    %p257 = scmp.ne.s32.totalorder %s245, %s246
    %p258 = scmp.eq.s32.totalorder %s26, 3
    %p259 = por %p257, %p258
    %p261 = scmp.ne.s32.totalorder %s246, %s260
    %p262 = scmp.eq.s32.totalorder %s26, 0
    %p263 = por %p261, %p262
    %s265 = sadd.s32 %s264, 1
    %p268 = scmp.eq.s32.totalorder %s20, 3
    %p269 = scmp.ne.s32.totalorder %s264, %s266
    %p270 = scmp.eq.s32.totalorder %s20, 0
    %p271 = por %p269, %p270
    %p272 = scmp.ne.s32.totalorder %s264, %s266
    %p273 = scmp.eq.s32.totalorder %s25, 3
    %p274 = por %p272, %p273
    %p275 = scmp.ne.s32.totalorder %s266, %s267
    %p276 = scmp.eq.s32.totalorder %s25, 0
    %p277 = por %p275, %p276
    %p278 = scmp.ne.s32.totalorder %s266, %s267
    %p279 = scmp.eq.s32.totalorder %s26, 3
    %p280 = por %p278, %p279
    %p282 = scmp.ne.s32.totalorder %s267, %s281
    %p283 = scmp.eq.s32.totalorder %s26, 0
    %p284 = por %p282, %p283
    %s286 = sadd.s32 %s285, 1
    %p289 = scmp.eq.s32.totalorder %s20, 3
    %p290 = scmp.ne.s32.totalorder %s285, %s287
    %p291 = scmp.eq.s32.totalorder %s20, 0
    %p292 = por %p290, %p291
    %p293 = scmp.ne.s32.totalorder %s285, %s287
    %p294 = scmp.eq.s32.totalorder %s25, 3
    %p295 = por %p293, %p294
    %p296 = scmp.ne.s32.totalorder %s287, %s288
    %p297 = scmp.eq.s32.totalorder %s25, 0
    %p298 = por %p296, %p297
    %p299 = scmp.ne.s32.totalorder %s287, %s288
    %p300 = scmp.eq.s32.totalorder %s26, 3
    %p301 = por %p299, %p300
    %p303 = scmp.ne.s32.totalorder %s288, %s302
    %p304 = scmp.eq.s32.totalorder %s26, 0
    %p305 = por %p303, %p304
    %s307 = sadd.s32 %s306, 1
    %p310 = scmp.eq.s32.totalorder %s20, 3
    %p311 = scmp.ne.s32.totalorder %s306, %s308
    %p312 = scmp.eq.s32.totalorder %s20, 0
    %p313 = por %p311, %p312
    %p314 = scmp.ne.s32.totalorder %s306, %s308
    %p315 = scmp.eq.s32.totalorder %s25, 3
    %p316 = por %p314, %p315
    %p317 = scmp.ne.s32.totalorder %s308, %s309
    %p318 = scmp.eq.s32.totalorder %s25, 0
    %p319 = por %p317, %p318
    %p320 = scmp.ne.s32.totalorder %s308, %s309
    %p321 = scmp.eq.s32.totalorder %s26, 3
    %p322 = por %p320, %p321
    %p324 = scmp.ne.s32.totalorder %s309, %s323
    %p325 = scmp.eq.s32.totalorder %s26, 0
    %p326 = por %p324, %p325
    %s327 = ssub.s32 %s20, %s27
    %p328 = scmp.eq.s32.totalorder %s327, 0
    %s330 = sadd.s32 %s329, 1
    %s331 = scalar_select %p328, %s329, %s330
    %p334 = pneg %p328
    %p335 = scmp.eq.s32.totalorder %s20, 3
    %p336 = por %p334, %p335
    %p337 = scmp.ne.s32.totalorder %s329, %s332
    %p338 = scmp.eq.s32.totalorder %s20, 0
    %p339 = por %p337, %p338
    %p340 = scmp.ne.s32.totalorder %s329, %s332
    %p341 = scmp.eq.s32.totalorder %s25, 3
    %p342 = por %p340, %p341
    %p343 = scmp.ne.s32.totalorder %s332, %s333
    %p344 = scmp.eq.s32.totalorder %s25, 0
    %p345 = por %p343, %p344
    %p346 = scmp.ne.s32.totalorder %s332, %s333
    %p347 = scmp.eq.s32.totalorder %s26, 3
    %p348 = por %p346, %p347
    %p350 = scmp.ne.s32.totalorder %s333, %s349
    %p351 = scmp.eq.s32.totalorder %s26, 0
    %p352 = por %p350, %p351
    %p353 = scmp.le.s32.totalorder 1, %s20
    %p354 = scmp.lt.s32.totalorder %s20, 5
    %p355 = pnand %p353, %p354
    %p356 = pneg %p355
    // Predicated region
    $region9: #{tpu_custom_call.1} parent=5 // pred_check
      _
    $region10: #{tpu_custom_call.1} parent=5 // pred_check_branch
      %358 = sbr.rel (%p355) target = $region12
    $region11: #{tpu_custom_call.1} parent=5 // pred_region
      %s359 = ssub.s32 %s20, 1
      // Predicated region
      $region13: #{tpu_custom_call.1} parent=11 // pred_check
        %p360 = pneg %p67
      $region14: #{tpu_custom_call.1} parent=11 // pred_check_branch
        %362 = sbr.rel (%p360) target = $region16
      $region15: #{tpu_custom_call.1} parent=11 // pred_region
        _
      $region16: #{tpu_custom_call.1} parent=11 // pred_fallthru
        _
      // Predicated region
      $region17: #{tpu_custom_call.1} parent=11 // pred_check
        %p363 = pneg %p88
      $region18: #{tpu_custom_call.1} parent=11 // pred_check_branch
        %365 = sbr.rel (%p363) target = $region20
      $region19: #{tpu_custom_call.1} parent=11 // pred_region
        _
      $region20: #{tpu_custom_call.1} parent=11 // pred_fallthru
        _
      // Predicated region
      $region21: #{tpu_custom_call.1} parent=11 // pred_check
        %p366 = pneg %p109
      $region22: #{tpu_custom_call.1} parent=11 // pred_check_branch
        %368 = sbr.rel (%p366) target = $region24
      $region23: #{tpu_custom_call.1} parent=11 // pred_region
        _
      $region24: #{tpu_custom_call.1} parent=11 // pred_fallthru
        _
      // Predicated region
      $region25: #{tpu_custom_call.1} parent=11 // pred_check
        %p369 = pneg %p130
      $region26: #{tpu_custom_call.1} parent=11 // pred_check_branch
        %371 = sbr.rel (%p369) target = $region28
      $region27: #{tpu_custom_call.1} parent=11 // pred_region
        _
      $region28: #{tpu_custom_call.1} parent=11 // pred_fallthru
        _
      // Predicated region
      $region29: #{tpu_custom_call.1} parent=11 // pred_check
        %p372 = pneg %p151
      $region30: #{tpu_custom_call.1} parent=11 // pred_check_branch
        %374 = sbr.rel (%p372) target = $region32
      $region31: #{tpu_custom_call.1} parent=11 // pred_region
        _
      $region32: #{tpu_custom_call.1} parent=11 // pred_fallthru
        _
      // Predicated region
      $region33: #{tpu_custom_call.1} parent=11 // pred_check
        %p375 = pneg %p172
      $region34: #{tpu_custom_call.1} parent=11 // pred_check_branch
        %377 = sbr.rel (%p375) target = $region36
      $region35: #{tpu_custom_call.1} parent=11 // pred_region
        _
      $region36: #{tpu_custom_call.1} parent=11 // pred_fallthru
        _
      // Predicated region
      $region37: #{tpu_custom_call.1} parent=11 // pred_check
        %p378 = pneg %p193
      $region38: #{tpu_custom_call.1} parent=11 // pred_check_branch
        %380 = sbr.rel (%p378) target = $region40
      $region39: #{tpu_custom_call.1} parent=11 // pred_region
        _
      $region40: #{tpu_custom_call.1} parent=11 // pred_fallthru
        _
      // Predicated region
      $region41: #{tpu_custom_call.1} parent=11 // pred_check
        %p381 = pneg %p214
      $region42: #{tpu_custom_call.1} parent=11 // pred_check_branch
        %383 = sbr.rel (%p381) target = $region44
      $region43: #{tpu_custom_call.1} parent=11 // pred_region
        _
      $region44: #{tpu_custom_call.1} parent=11 // pred_fallthru
        _
      // Predicated region
      $region45: #{tpu_custom_call.1} parent=11 // pred_check
        %p384 = pneg %p235
      $region46: #{tpu_custom_call.1} parent=11 // pred_check_branch
        %386 = sbr.rel (%p384) target = $region48
      $region47: #{tpu_custom_call.1} parent=11 // pred_region
        _
      $region48: #{tpu_custom_call.1} parent=11 // pred_fallthru
        _
      // Predicated region
      $region49: #{tpu_custom_call.1} parent=11 // pred_check
        %p387 = pneg %p256
      $region50: #{tpu_custom_call.1} parent=11 // pred_check_branch
        %389 = sbr.rel (%p387) target = $region52
      $region51: #{tpu_custom_call.1} parent=11 // pred_region
        _
      $region52: #{tpu_custom_call.1} parent=11 // pred_fallthru
        _
      // Predicated region
      $region53: #{tpu_custom_call.1} parent=11 // pred_check
        %p390 = pneg %p277
      $region54: #{tpu_custom_call.1} parent=11 // pred_check_branch
        %392 = sbr.rel (%p390) target = $region56
      $region55: #{tpu_custom_call.1} parent=11 // pred_region
        _
      $region56: #{tpu_custom_call.1} parent=11 // pred_fallthru
        _
      // Predicated region
      $region57: #{tpu_custom_call.1} parent=11 // pred_check
        %p393 = pneg %p298
      $region58: #{tpu_custom_call.1} parent=11 // pred_check_branch
        %395 = sbr.rel (%p393) target = $region60
      $region59: #{tpu_custom_call.1} parent=11 // pred_region
        _
      $region60: #{tpu_custom_call.1} parent=11 // pred_fallthru
        _
      // Predicated region
      $region61: #{tpu_custom_call.1} parent=11 // pred_check
        %p396 = pneg %p319
      $region62: #{tpu_custom_call.1} parent=11 // pred_check_branch
        %398 = sbr.rel (%p396) target = $region64
      $region63: #{tpu_custom_call.1} parent=11 // pred_region
        _
      $region64: #{tpu_custom_call.1} parent=11 // pred_fallthru
        _
    $region12: #{tpu_custom_call.1} parent=5 // pred_fallthru
      _
    %p399 = scmp.lt.s32.totalorder %s20, 4
    // Predicated region
    $region65: #{tpu_custom_call.1} parent=5 // pred_check
      %p400 = pneg %p399
    $region66: #{tpu_custom_call.1} parent=5 // pred_check_branch
      %402 = sbr.rel (%p400) target = $region68
    $region67: #{tpu_custom_call.1} parent=5 // pred_region
      // Predicated region
      $region69: #{tpu_custom_call.1} parent=67 // pred_check
        %p403 = pneg %p40
      $region70: #{tpu_custom_call.1} parent=67 // pred_check_branch
        %405 = sbr.rel (%p403) target = $region72
      $region71: #{tpu_custom_call.1} parent=67 // pred_region
        %s406 = smul.u32 2, %s20
        %p407 = scmp.lt.s32.totalorder %s406, 7
        %s408 = scalar_select %p407, %s406, 7
        %s409 = smul.addr %s408, 8
        %s410 = scalar_lea.vmem %s0, %s409
        %s411 = smul.u32 2, %s20
      $region72: #{tpu_custom_call.1} parent=67 // pred_fallthru
        _
    $region68: #{tpu_custom_call.1} parent=5 // pred_fallthru
      _
    %p412 = scmp.le.s32.totalorder 1, %s20
    %p413 = scmp.lt.s32.totalorder %s20, 5
    %p414 = pnand %p412, %p413
    %p415 = pneg %p414
    // Predicated region
    $region73: #{tpu_custom_call.1} parent=5 // pred_check
      _
    $region74: #{tpu_custom_call.1} parent=5 // pred_check_branch
      %417 = sbr.rel (%p414) target = $region76
    $region75: #{tpu_custom_call.1} parent=5 // pred_region
      %s418 = ssub.s32 %s20, 1
      %s419 = smul.u32 2, %s25
      %p420 = scmp.lt.s32.totalorder %s419, 7
      %s421 = scalar_select %p420, %s419, 7
      %s422 = smul.addr %s421, 8
      %s423 = scalar_lea.vmem %s0, %s422
      %p424 = pneg %p46
      %p425 = pneg %p43
      %p426 = pneg %p67
      %p427 = pneg %p64
      %p428 = pneg %p88
      %p429 = pneg %p85
      %p430 = pneg %p109
      %p431 = pneg %p106
      %p432 = pneg %p130
      %p433 = pneg %p127
      %p434 = pneg %p151
      %p435 = pneg %p148
      %p436 = pneg %p172
      %p437 = pneg %p169
      %p438 = pneg %p193
      %p439 = pneg %p190
      %p440 = pneg %p214
      %p441 = pneg %p211
      %p442 = pneg %p235
      %p443 = pneg %p232
      %p444 = pneg %p256
      %p445 = pneg %p253
      %p446 = pneg %p277
      %p447 = pneg %p274
      %p448 = pneg %p298
      %p449 = pneg %p295
      %p450 = pneg %p319
      %p451 = pneg %p316
      %p452 = pneg %p345
      %p453 = pneg %p342
      %s454 = smul.u32 2, %s25
      %p455 = scmp.lt.s32.totalorder %s454, 7
      %s456 = scalar_select %p455, %s454, 7
      %s457 = smul.addr %s456, 8
      %s458 = scalar_lea.vmem %s14, %s457
      %s459 = smul.u32 2, %s25
      %p460 = scmp.lt.s32.totalorder %s459, 7
      %s461 = scalar_select %p460, %s459, 7
      %s462 = smul.addr %s461, 8
      %s463 = scalar_lea.vmem %s0, %s462
      %s464 = smul.u32 2, %s25
      %s465 = smul.u32 2, %s25
      %p466 = scmp.lt.s32.totalorder %s465, 7
      %s467 = scalar_select %p466, %s465, 7
      %s468 = smul.addr %s467, 8
      %s469 = scalar_lea.vmem %s14, %s468
      %s470 = smul.u32 2, %s25
      %v472 = vld [vmem:[%s463] sm:$0xff]
      %v473 = vld [vmem:[%s463 + $0x8] sm:$0xff]
      %v474 = vld [vmem:[%s1] sm:$0xff]
      %v475 = vadd.f32 %v472, %v474
      %v476 = vadd.f32 %v473, %v474
      %v477 = vpack.c.bf16 %v476, %v475
      %v478 = vld [vmem:[%s2] sm:$0xf]
      %v479 = vld [vmem:[%s2 + $0x4] sm:$0xf]
      %v480 = vld [vmem:[%s2 + $0x8] sm:$0xf]
      %v481 = vld [vmem:[%s2 + $0xc] sm:$0xf]
      %v482 = vld [vmem:[%s3] sm:$0x1]
      %v484 = vperm.slane %v482, 0
      %v490 = vunpack.c.l.b16 %v478
      %v491 = vunpack.c.l.b16 %v479
      %v492 = vunpack.c.l.b16 %v480
      %v493 = vunpack.c.l.b16 %v481
      %v494 = vpack.c.b16 %v491, %v490
      %v495 = vpack.c.b16 %v493, %v492
      %vm498 = vcmask 261120
      %v500 = vsel %vm498, %v477, 0
      %502 = vmatpush.bf16.msra.mxu0 0
      %503 = vmatpush.bf16.msra.mxu0 0
      %504 = vmatpush.bf16.msra.mxu0 0
      %505 = vmatpush.bf16.msra.mxu0 0
      %506 = vmatpush.bf16.msra.mxu0 0
      %507 = vmatpush.bf16.msra.mxu0 0
      %508 = vmatpush.bf16.msra.mxu0 %v495
      %509 = vmatpush.bf16.msra.mxu0 %v494
      %510 = vmatmul.bf16.gmra.mxu0 %v500
      %v511 = vpop.f32.mrf.mxu0
      %v512 = vadd.f32 %v484, %v511
      %v513 = vpop.f32.mrf.mxu0
      %v514 = vadd.f32 %v484, %v513
      %515 = vdwg.mxu0
      %v516 = vpack.c.bf16 %v512, %v512
      %v517 = vpack.c.bf16 %v514, %v514
      %v519 = vunpack.c.l.b16 %v516
      %v520 = vpack.c.b16 %v519, %v519
      %521 = vrot.lane.b32.xlu0 %v520, 96
      %v522 = vpop.permute.xlu0 %521
      %vm523 = vcmask 64512
      %v525 = vsel %vm523, %v516, 0
      %v528 = vsel %vm523, %v522, 0
      %530 = vmatpush.bf16.xpose.msra.mxu0 0
      %531 = vmatpush.bf16.xpose.msra.mxu0 0
      %532 = vmatpush.bf16.xpose.msra.mxu0 0
      %533 = vmatpush.bf16.xpose.msra.mxu0 0
      %534 = vmatpush.bf16.xpose.msra.mxu0 0
      %535 = vmatpush.bf16.xpose.msra.mxu0 0
      %536 = vmatpush.bf16.xpose.msra.mxu0 0
      %537 = vmatpush.bf16.xpose.msra.mxu0 %v528
      %538 = vmatmul.bf16.gmra.mxu0 %v525
      %v539 = vpop.f32.mrf.mxu0
      %v540 = vadd.f32 0.0, %v539
      %v541 = vpop.f32.mrf.mxu0
      %542 = vdwg.mxu0
      %v544 = vunpack.c.l.b16 %v517
      %v545 = vpack.c.b16 %v544, %v544
      %546 = vrot.lane.b32.xlu0 %v545, 96
      %v547 = vpop.permute.xlu0 %546
      %v549 = vsel %vm523, %v517, 0
      %v552 = vsel %vm523, %v547, 0
      %554 = vmatpush.bf16.xpose.msra.mxu0 0
      %555 = vmatpush.bf16.xpose.msra.mxu0 0
      %556 = vmatpush.bf16.xpose.msra.mxu0 0
      %557 = vmatpush.bf16.xpose.msra.mxu0 0
      %558 = vmatpush.bf16.xpose.msra.mxu0 0
      %559 = vmatpush.bf16.xpose.msra.mxu0 0
      %560 = vmatpush.bf16.xpose.msra.mxu0 0
      %561 = vmatpush.bf16.xpose.msra.mxu0 %v552
      %562 = vmatmul.bf16.gmra.mxu0 %v549
      %v563 = vpop.f32.mrf.mxu0
      %v564 = vadd.f32 0.0, %v563
      %v565 = vpop.f32.mrf.mxu0
      %566 = vdwg.mxu0
      %v567 = vsel %vm523, %v540, -inf
      %568 = vmax.xlane.f32.xlu0 %v567
      %v569 = vpop.xlane.xlu0 %568
      %v570 = vsel %vm523, %v564, -inf
      %571 = vmax.xlane.f32.xlu0 %v570
      %v572 = vpop.xlane.xlu0 %571
      %v573 = vsub.f32 %v540, %v569
      %v574 = vsub.f32 %v564, %v572
      %v575 = vmul.f32 %v573, 1.442695
      %v576 = vpow.pop %v575
      %v577 = vmul.f32 %v574, 1.442695
      %v578 = vpow.pop %v577
      %v579 = vsel %vm523, %v576, 0.0
      %580 = vadd.xlane.f32.xlu0 %v579
      %v581 = vpop.xlane.xlu0 %580
      %v582 = vsel %vm523, %v578, 0.0
      %583 = vadd.xlane.f32.xlu0 %v582
      %v584 = vpop.xlane.xlu0 %583
      %v585 = vrcp.pop %v581
      %v586 = vrcp.pop %v584
      %v587 = vmul.f32 %v576, %v585
      %v588 = vmul.f32 %v578, %v586
      %v589 = vpack.c.bf16 %v587, %v587
      %v590 = vpack.c.bf16 %v588, %v588
      %591 = vrot.lane.b32.xlu0 %v520, 64
      %v592 = vpop.permute.xlu0 %591
      %v594 = vsel %vm523, %v589, 0
      %vm596 = vcmask 1043456
      %v598 = vsel %vm596, %v592, 0
      %600 = vmatpush.bf16.msra.mxu0 0
      %601 = vmatpush.bf16.msra.mxu0 0
      %602 = vmatpush.bf16.msra.mxu0 0
      %603 = vmatpush.bf16.msra.mxu0 0
      %604 = vmatpush.bf16.msra.mxu0 0
      %605 = vmatpush.bf16.msra.mxu0 0
      %606 = vmatpush.bf16.msra.mxu0 0
      %607 = vmatpush.bf16.msra.mxu0 %v598
      %608 = vmatmul.bf16.gmra.mxu0 %v594
      %v609 = vpop.f32.mrf.mxu0
      %v610 = vadd.f32 0.0, %v609
      %v611 = vpop.f32.mrf.mxu0
      %612 = vdwg.mxu0
      %613 = vrot.lane.b32.xlu0 %v545, 64
      %v614 = vpop.permute.xlu0 %613
      %v616 = vsel %vm523, %v590, 0
      %v619 = vsel %vm596, %v614, 0
      %621 = vmatpush.bf16.msra.mxu0 0
      %622 = vmatpush.bf16.msra.mxu0 0
      %623 = vmatpush.bf16.msra.mxu0 0
      %624 = vmatpush.bf16.msra.mxu0 0
      %625 = vmatpush.bf16.msra.mxu0 0
      %626 = vmatpush.bf16.msra.mxu0 0
      %627 = vmatpush.bf16.msra.mxu0 0
      %628 = vmatpush.bf16.msra.mxu0 %v619
      %629 = vmatmul.bf16.gmra.mxu0 %v616
      %v630 = vpop.f32.mrf.mxu0
      %v631 = vadd.f32 0.0, %v630
      %v632 = vpop.f32.mrf.mxu0
      %633 = vdwg.mxu0
      %v634 = vpack.c.bf16 %v631, %v610
      %v635 = vld [vmem:[%s4] sm:$0xf]
      %636 = vrot.lane.b32.xlu0 %v520, 120
      %v637 = vpop.permute.xlu0 %636
      %638 = vrot.lane.b32.xlu0 %v520, 88
      %v639 = vpop.permute.xlu0 %638
      %v641 = vsel %vm523, %v637, 0
      %v644 = vsel %vm523, %v639, 0
      %646 = vmatpush.bf16.xpose.msra.mxu0 0
      %647 = vmatpush.bf16.xpose.msra.mxu0 0
      %648 = vmatpush.bf16.xpose.msra.mxu0 0
      %649 = vmatpush.bf16.xpose.msra.mxu0 0
      %650 = vmatpush.bf16.xpose.msra.mxu0 0
      %651 = vmatpush.bf16.xpose.msra.mxu0 0
      %652 = vmatpush.bf16.xpose.msra.mxu0 0
      %653 = vmatpush.bf16.xpose.msra.mxu0 %v644
      %654 = vmatmul.bf16.gmra.mxu0 %v641
      %v655 = vpop.f32.mrf.mxu0
      %v656 = vadd.f32 0.0, %v655
      %v657 = vpop.f32.mrf.mxu0
      %658 = vdwg.mxu0
      %659 = vrot.lane.b32.xlu0 %v545, 120
      %v660 = vpop.permute.xlu0 %659
      %661 = vrot.lane.b32.xlu0 %v545, 88
      %v662 = vpop.permute.xlu0 %661
      %v664 = vsel %vm523, %v660, 0
      %v667 = vsel %vm523, %v662, 0
      %669 = vmatpush.bf16.xpose.msra.mxu0 0
      %670 = vmatpush.bf16.xpose.msra.mxu0 0
      %671 = vmatpush.bf16.xpose.msra.mxu0 0
      %672 = vmatpush.bf16.xpose.msra.mxu0 0
      %673 = vmatpush.bf16.xpose.msra.mxu0 0
      %674 = vmatpush.bf16.xpose.msra.mxu0 0
      %675 = vmatpush.bf16.xpose.msra.mxu0 0
      %676 = vmatpush.bf16.xpose.msra.mxu0 %v667
      %677 = vmatmul.bf16.gmra.mxu0 %v664
      %v678 = vpop.f32.mrf.mxu0
      %v679 = vadd.f32 0.0, %v678
      %v680 = vpop.f32.mrf.mxu0
      %681 = vdwg.mxu0
      %v682 = vsel %vm523, %v656, -inf
      %683 = vmax.xlane.f32.xlu0 %v682
      %v684 = vpop.xlane.xlu0 %683
      %v685 = vsel %vm523, %v679, -inf
      %686 = vmax.xlane.f32.xlu0 %v685
      %v687 = vpop.xlane.xlu0 %686
      %v688 = vsub.f32 %v656, %v684
      %v689 = vsub.f32 %v679, %v687
      %v690 = vmul.f32 %v688, 1.442695
      %v691 = vpow.pop %v690
      %v692 = vmul.f32 %v689, 1.442695
      %v693 = vpow.pop %v692
      %v694 = vsel %vm523, %v691, 0.0
      %695 = vadd.xlane.f32.xlu0 %v694
      %v696 = vpop.xlane.xlu0 %695
      %v697 = vsel %vm523, %v693, 0.0
      %698 = vadd.xlane.f32.xlu0 %v697
      %v699 = vpop.xlane.xlu0 %698
      %v700 = vrcp.pop %v696
      %v701 = vrcp.pop %v699
      %v702 = vmul.f32 %v691, %v700
      %v703 = vmul.f32 %v693, %v701
      %v704 = vpack.c.bf16 %v702, %v702
      %v705 = vpack.c.bf16 %v703, %v703
      %706 = vrot.lane.b32.xlu0 %v520, 56
      %v707 = vpop.permute.xlu0 %706
      %v709 = vsel %vm523, %v704, 0
      %v712 = vsel %vm596, %v707, 0
      %714 = vmatpush.bf16.msra.mxu0 0
      %715 = vmatpush.bf16.msra.mxu0 0
      %716 = vmatpush.bf16.msra.mxu0 0
      %717 = vmatpush.bf16.msra.mxu0 0
      %718 = vmatpush.bf16.msra.mxu0 0
      %719 = vmatpush.bf16.msra.mxu0 0
      %720 = vmatpush.bf16.msra.mxu0 0
      %721 = vmatpush.bf16.msra.mxu0 %v712
      %722 = vmatmul.bf16.gmra.mxu0 %v709
      %v723 = vpop.f32.mrf.mxu0
      %v724 = vadd.f32 0.0, %v723
      %v725 = vpop.f32.mrf.mxu0
      %726 = vdwg.mxu0
      %727 = vrot.lane.b32.xlu0 %v545, 56
      %v728 = vpop.permute.xlu0 %727
      %v730 = vsel %vm523, %v705, 0
      %v733 = vsel %vm596, %v728, 0
      %735 = vmatpush.bf16.msra.mxu0 0
      %736 = vmatpush.bf16.msra.mxu0 0
      %737 = vmatpush.bf16.msra.mxu0 0
      %738 = vmatpush.bf16.msra.mxu0 0
      %739 = vmatpush.bf16.msra.mxu0 0
      %740 = vmatpush.bf16.msra.mxu0 0
      %741 = vmatpush.bf16.msra.mxu0 0
      %742 = vmatpush.bf16.msra.mxu0 %v733
      %743 = vmatmul.bf16.gmra.mxu0 %v730
      %v744 = vpop.f32.mrf.mxu0
      %v745 = vadd.f32 0.0, %v744
      %v746 = vpop.f32.mrf.mxu0
      %747 = vdwg.mxu0
      %v748 = vpack.c.bf16 %v745, %v724
      %v749 = vld [vmem:[%s4 + $0x4] sm:$0xf]
      %v751 = vsel %vm523, %v748, 0
      %v754 = vsel %vm596, %v749, 0
      %756 = vmatpush.bf16.msra.mxu0 0
      %757 = vmatpush.bf16.msra.mxu0 0
      %758 = vmatpush.bf16.msra.mxu0 0
      %759 = vmatpush.bf16.msra.mxu0 0
      %760 = vmatpush.bf16.msra.mxu0 0
      %761 = vmatpush.bf16.msra.mxu0 0
      %762 = vmatpush.bf16.msra.mxu0 0
      %763 = vmatpush.bf16.msra.mxu0 %v754
      %764 = vmatmul.bf16.gmra.mxu0 %v751
      %v765 = vpop.f32.mrf.mxu0
      %v766 = vadd.f32 0.0, %v765
      %v767 = vpop.f32.mrf.mxu0
      %v768 = vadd.f32 0.0, %v767
      %769 = vdwg.mxu0
      %v771 = vsel %vm523, %v634, 0
      %v774 = vsel %vm596, %v635, 0
      %776 = vmatpush.bf16.msra.mxu0 0
      %777 = vmatpush.bf16.msra.mxu0 0
      %778 = vmatpush.bf16.msra.mxu0 0
      %779 = vmatpush.bf16.msra.mxu0 0
      %780 = vmatpush.bf16.msra.mxu0 0
      %781 = vmatpush.bf16.msra.mxu0 0
      %782 = vmatpush.bf16.msra.mxu0 0
      %783 = vmatpush.bf16.msra.mxu0 %v774
      %784 = vmatmul.bf16.gmra.mxu0 %v771
      %v785 = vpop.f32.mrf.mxu0
      %v786 = vadd.f32 %v766, %v785
      %v787 = vpop.f32.mrf.mxu0
      %v788 = vadd.f32 %v768, %v787
      %789 = vdwg.mxu0
      %790 = vrot.lane.b32.xlu0 %v520, 112
      %v791 = vpop.permute.xlu0 %790
      %792 = vrot.lane.b32.xlu0 %v520, 80
      %v793 = vpop.permute.xlu0 %792
      %v795 = vsel %vm523, %v791, 0
      %v798 = vsel %vm523, %v793, 0
      %800 = vmatpush.bf16.xpose.msra.mxu0 0
      %801 = vmatpush.bf16.xpose.msra.mxu0 0
      %802 = vmatpush.bf16.xpose.msra.mxu0 0
      %803 = vmatpush.bf16.xpose.msra.mxu0 0
      %804 = vmatpush.bf16.xpose.msra.mxu0 0
      %805 = vmatpush.bf16.xpose.msra.mxu0 0
      %806 = vmatpush.bf16.xpose.msra.mxu0 0
      %807 = vmatpush.bf16.xpose.msra.mxu0 %v798
      %808 = vmatmul.bf16.gmra.mxu0 %v795
      %v809 = vpop.f32.mrf.mxu0
      %v810 = vadd.f32 0.0, %v809
      %v811 = vpop.f32.mrf.mxu0
      %812 = vdwg.mxu0
      %813 = vrot.lane.b32.xlu0 %v545, 112
      %v814 = vpop.permute.xlu0 %813
      %815 = vrot.lane.b32.xlu0 %v545, 80
      %v816 = vpop.permute.xlu0 %815
      %v818 = vsel %vm523, %v814, 0
      %v821 = vsel %vm523, %v816, 0
      %823 = vmatpush.bf16.xpose.msra.mxu0 0
      %824 = vmatpush.bf16.xpose.msra.mxu0 0
      %825 = vmatpush.bf16.xpose.msra.mxu0 0
      %826 = vmatpush.bf16.xpose.msra.mxu0 0
      %827 = vmatpush.bf16.xpose.msra.mxu0 0
      %828 = vmatpush.bf16.xpose.msra.mxu0 0
      %829 = vmatpush.bf16.xpose.msra.mxu0 0
      %830 = vmatpush.bf16.xpose.msra.mxu0 %v821
      %831 = vmatmul.bf16.gmra.mxu0 %v818
      %v832 = vpop.f32.mrf.mxu0
      %v833 = vadd.f32 0.0, %v832
      %v834 = vpop.f32.mrf.mxu0
      %835 = vdwg.mxu0
      %v836 = vsel %vm523, %v810, -inf
      %837 = vmax.xlane.f32.xlu0 %v836
      %v838 = vpop.xlane.xlu0 %837
      %v839 = vsel %vm523, %v833, -inf
      %840 = vmax.xlane.f32.xlu0 %v839
      %v841 = vpop.xlane.xlu0 %840
      %v842 = vsub.f32 %v810, %v838
      %v843 = vsub.f32 %v833, %v841
      %v844 = vmul.f32 %v842, 1.442695
      %v845 = vpow.pop %v844
      %v846 = vmul.f32 %v843, 1.442695
      %v847 = vpow.pop %v846
      %v848 = vsel %vm523, %v845, 0.0
      %849 = vadd.xlane.f32.xlu0 %v848
      %v850 = vpop.xlane.xlu0 %849
      %v851 = vsel %vm523, %v847, 0.0
      %852 = vadd.xlane.f32.xlu0 %v851
      %v853 = vpop.xlane.xlu0 %852
      %v854 = vrcp.pop %v850
      %v855 = vrcp.pop %v853
      %v856 = vmul.f32 %v845, %v854
      %v857 = vmul.f32 %v847, %v855
      %v858 = vpack.c.bf16 %v856, %v856
      %v859 = vpack.c.bf16 %v857, %v857
      %860 = vrot.lane.b32.xlu0 %v520, 48
      %v861 = vpop.permute.xlu0 %860
      %v863 = vsel %vm523, %v858, 0
      %v866 = vsel %vm596, %v861, 0
      %868 = vmatpush.bf16.msra.mxu0 0
      %869 = vmatpush.bf16.msra.mxu0 0
      %870 = vmatpush.bf16.msra.mxu0 0
      %871 = vmatpush.bf16.msra.mxu0 0
      %872 = vmatpush.bf16.msra.mxu0 0
      %873 = vmatpush.bf16.msra.mxu0 0
      %874 = vmatpush.bf16.msra.mxu0 0
      %875 = vmatpush.bf16.msra.mxu0 %v866
      %876 = vmatmul.bf16.gmra.mxu0 %v863
      %v877 = vpop.f32.mrf.mxu0
      %v878 = vadd.f32 0.0, %v877
      %v879 = vpop.f32.mrf.mxu0
      %880 = vdwg.mxu0
      %881 = vrot.lane.b32.xlu0 %v545, 48
      %v882 = vpop.permute.xlu0 %881
      %v884 = vsel %vm523, %v859, 0
      %v887 = vsel %vm596, %v882, 0
      %889 = vmatpush.bf16.msra.mxu0 0
      %890 = vmatpush.bf16.msra.mxu0 0
      %891 = vmatpush.bf16.msra.mxu0 0
      %892 = vmatpush.bf16.msra.mxu0 0
      %893 = vmatpush.bf16.msra.mxu0 0
      %894 = vmatpush.bf16.msra.mxu0 0
      %895 = vmatpush.bf16.msra.mxu0 0
      %896 = vmatpush.bf16.msra.mxu0 %v887
      %897 = vmatmul.bf16.gmra.mxu0 %v884
      %v898 = vpop.f32.mrf.mxu0
      %v899 = vadd.f32 0.0, %v898
      %v900 = vpop.f32.mrf.mxu0
      %901 = vdwg.mxu0
      %v902 = vpack.c.bf16 %v899, %v878
      %v903 = vld [vmem:[%s4 + $0x8] sm:$0xf]
      %v905 = vsel %vm523, %v902, 0
      %v908 = vsel %vm596, %v903, 0
      %910 = vmatpush.bf16.msra.mxu0 0
      %911 = vmatpush.bf16.msra.mxu0 0
      %912 = vmatpush.bf16.msra.mxu0 0
      %913 = vmatpush.bf16.msra.mxu0 0
      %914 = vmatpush.bf16.msra.mxu0 0
      %915 = vmatpush.bf16.msra.mxu0 0
      %916 = vmatpush.bf16.msra.mxu0 0
      %917 = vmatpush.bf16.msra.mxu0 %v908
      %918 = vmatmul.bf16.gmra.mxu0 %v905
      %v919 = vpop.f32.mrf.mxu0
      %v920 = vadd.f32 0.0, %v919
      %v921 = vpop.f32.mrf.mxu0
      %v922 = vadd.f32 0.0, %v921
      %923 = vdwg.mxu0
      %v924 = vadd.f32 %v786, %v920
      %v925 = vadd.f32 %v788, %v922
      %926 = vrot.lane.b32.xlu0 %v520, 104
      %v927 = vpop.permute.xlu0 %926
      %928 = vrot.lane.b32.xlu0 %v520, 72
      %v929 = vpop.permute.xlu0 %928
      %v931 = vsel %vm523, %v927, 0
      %v934 = vsel %vm523, %v929, 0
      %936 = vmatpush.bf16.xpose.msra.mxu0 0
      %937 = vmatpush.bf16.xpose.msra.mxu0 0
      %938 = vmatpush.bf16.xpose.msra.mxu0 0
      %939 = vmatpush.bf16.xpose.msra.mxu0 0
      %940 = vmatpush.bf16.xpose.msra.mxu0 0
      %941 = vmatpush.bf16.xpose.msra.mxu0 0
      %942 = vmatpush.bf16.xpose.msra.mxu0 0
      %943 = vmatpush.bf16.xpose.msra.mxu0 %v934
      %944 = vmatmul.bf16.gmra.mxu0 %v931
      %v945 = vpop.f32.mrf.mxu0
      %v946 = vadd.f32 0.0, %v945
      %v947 = vpop.f32.mrf.mxu0
      %948 = vdwg.mxu0
      %949 = vrot.lane.b32.xlu0 %v545, 104
      %v950 = vpop.permute.xlu0 %949
      %951 = vrot.lane.b32.xlu0 %v545, 72
      %v952 = vpop.permute.xlu0 %951
      %v954 = vsel %vm523, %v950, 0
      %v957 = vsel %vm523, %v952, 0
      %959 = vmatpush.bf16.xpose.msra.mxu0 0
      %960 = vmatpush.bf16.xpose.msra.mxu0 0
      %961 = vmatpush.bf16.xpose.msra.mxu0 0
      %962 = vmatpush.bf16.xpose.msra.mxu0 0
      %963 = vmatpush.bf16.xpose.msra.mxu0 0
      %964 = vmatpush.bf16.xpose.msra.mxu0 0
      %965 = vmatpush.bf16.xpose.msra.mxu0 0
      %966 = vmatpush.bf16.xpose.msra.mxu0 %v957
      %967 = vmatmul.bf16.gmra.mxu0 %v954
      %v968 = vpop.f32.mrf.mxu0
      %v969 = vadd.f32 0.0, %v968
      %v970 = vpop.f32.mrf.mxu0
      %971 = vdwg.mxu0
      %v972 = vsel %vm523, %v946, -inf
      %973 = vmax.xlane.f32.xlu0 %v972
      %v974 = vpop.xlane.xlu0 %973
      %v975 = vsel %vm523, %v969, -inf
      %976 = vmax.xlane.f32.xlu0 %v975
      %v977 = vpop.xlane.xlu0 %976
      %v978 = vsub.f32 %v946, %v974
      %v979 = vsub.f32 %v969, %v977
      %v980 = vmul.f32 %v978, 1.442695
      %v981 = vpow.pop %v980
      %v982 = vmul.f32 %v979, 1.442695
      %v983 = vpow.pop %v982
      %v984 = vsel %vm523, %v981, 0.0
      %985 = vadd.xlane.f32.xlu0 %v984
      %v986 = vpop.xlane.xlu0 %985
      %v987 = vsel %vm523, %v983, 0.0
      %988 = vadd.xlane.f32.xlu0 %v987
      %v989 = vpop.xlane.xlu0 %988
      %v990 = vrcp.pop %v986
      %v991 = vrcp.pop %v989
      %v992 = vmul.f32 %v981, %v990
      %v993 = vmul.f32 %v983, %v991
      %v994 = vpack.c.bf16 %v992, %v992
      %v995 = vpack.c.bf16 %v993, %v993
      %996 = vrot.lane.b32.xlu0 %v520, 40
      %v997 = vpop.permute.xlu0 %996
      %v999 = vsel %vm523, %v994, 0
      %v1002 = vsel %vm596, %v997, 0
      %1004 = vmatpush.bf16.msra.mxu0 0
      %1005 = vmatpush.bf16.msra.mxu0 0
      %1006 = vmatpush.bf16.msra.mxu0 0
      %1007 = vmatpush.bf16.msra.mxu0 0
      %1008 = vmatpush.bf16.msra.mxu0 0
      %1009 = vmatpush.bf16.msra.mxu0 0
      %1010 = vmatpush.bf16.msra.mxu0 0
      %1011 = vmatpush.bf16.msra.mxu0 %v1002
      %1012 = vmatmul.bf16.gmra.mxu0 %v999
      %v1013 = vpop.f32.mrf.mxu0
      %v1014 = vadd.f32 0.0, %v1013
      %v1015 = vpop.f32.mrf.mxu0
      %1016 = vdwg.mxu0
      %1017 = vrot.lane.b32.xlu0 %v545, 40
      %v1018 = vpop.permute.xlu0 %1017
      %v1020 = vsel %vm523, %v995, 0
      %v1023 = vsel %vm596, %v1018, 0
      %1025 = vmatpush.bf16.msra.mxu0 0
      %1026 = vmatpush.bf16.msra.mxu0 0
      %1027 = vmatpush.bf16.msra.mxu0 0
      %1028 = vmatpush.bf16.msra.mxu0 0
      %1029 = vmatpush.bf16.msra.mxu0 0
      %1030 = vmatpush.bf16.msra.mxu0 0
      %1031 = vmatpush.bf16.msra.mxu0 0
      %1032 = vmatpush.bf16.msra.mxu0 %v1023
      %1033 = vmatmul.bf16.gmra.mxu0 %v1020
      %v1034 = vpop.f32.mrf.mxu0
      %v1035 = vadd.f32 0.0, %v1034
      %v1036 = vpop.f32.mrf.mxu0
      %1037 = vdwg.mxu0
      %v1038 = vpack.c.bf16 %v1035, %v1014
      %v1039 = vld [vmem:[%s4 + $0xc] sm:$0xf]
      %v1041 = vsel %vm523, %v1038, 0
      %v1044 = vsel %vm596, %v1039, 0
      %1046 = vmatpush.bf16.msra.mxu0 0
      %1047 = vmatpush.bf16.msra.mxu0 0
      %1048 = vmatpush.bf16.msra.mxu0 0
      %1049 = vmatpush.bf16.msra.mxu0 0
      %1050 = vmatpush.bf16.msra.mxu0 0
      %1051 = vmatpush.bf16.msra.mxu0 0
      %1052 = vmatpush.bf16.msra.mxu0 0
      %1053 = vmatpush.bf16.msra.mxu0 %v1044
      %1054 = vmatmul.bf16.gmra.mxu0 %v1041
      %v1055 = vpop.f32.mrf.mxu0
      %v1056 = vadd.f32 0.0, %v1055
      %v1057 = vpop.f32.mrf.mxu0
      %v1058 = vadd.f32 0.0, %v1057
      %1059 = vdwg.mxu0
      %v1060 = vadd.f32 %v924, %v1056
      %v1061 = vadd.f32 %v925, %v1058
      %v1062 = vld [vmem:[%s5] sm:$0x1]
      %v1064 = vperm.slane %v1062, 0
      %v1066 = vadd.f32 %v1060, %v1064
      %v1067 = vadd.f32 %v1061, %v1064
      %v1068 = vadd.f32 %v475, %v1066
      %v1069 = vadd.f32 %v476, %v1067
      %v1070 = vld [vmem:[%s6] sm:$0x1]
      %v1071 = vld [vmem:[%s7] sm:$0x1]
      %v1072 = vsel %vm498, %v1068, 0.0
      %1073 = vadd.xlane.f32.xlu0 %v1072
      %v1074 = vpop.xlane.xlu0 %1073
      %v1075 = vsel %vm498, %v1069, 0.0
      %1076 = vadd.xlane.f32.xlu0 %v1075
      %v1077 = vpop.xlane.xlu0 %1076
      %v1078 = vrcp.pop 32.0
      %v1079 = vmul.f32 32.0, %v1078
      %v1080 = vsub.f32 1.0, %v1079
      %v1081 = vmul.f32 %v1078, %v1080
      %v1082 = vadd.f32 %v1078, %v1081
      %vm1083 = vweird.f32 %v1078
      %v1084 = vsel %vm1083, %v1078, %v1082
      %v1085 = vmul.f32 %v1074, %v1084
      %v1086 = vmul.f32 %v1077, %v1084
      %v1087 = vsub.f32 %v1068, %v1085
      %v1088 = vsub.f32 %v1069, %v1086
      %v1089 = vmul.f32 %v1087, %v1087
      %v1090 = vmul.f32 %v1088, %v1088
      %v1091 = vsel %vm498, %v1089, 0.0
      %1092 = vadd.xlane.f32.xlu0 %v1091
      %v1093 = vpop.xlane.xlu0 %1092
      %v1094 = vsel %vm498, %v1090, 0.0
      %1095 = vadd.xlane.f32.xlu0 %v1094
      %v1096 = vpop.xlane.xlu0 %1095
      %v1097 = vmul.f32 %v1093, %v1084
      %v1098 = vmul.f32 %v1096, %v1084
      %v1099 = vadd.f32 %v1097, 1e-05
      %v1100 = vadd.f32 %v1098, 1e-05
      %v1101 = vrsqrt.pop %v1099
      %v1102 = vmul.f32 %v1101, %v1099
      %v1103 = vmul.f32 %v1102, %v1101
      %v1104 = vmul.f32 0.5, %v1103
      %v1105 = vsub.f32 1.5, %v1104
      %v1106 = vmul.f32 %v1101, %v1105
      %vm1107 = vweird.f32 %v1099
      %vm1108 = vweird.f32 %v1101
      %vm1109 = vmor %vm1107, %vm1108
      %v1110 = vsel %vm1109, %v1101, %v1106
      %v1111 = vrsqrt.pop %v1100
      %v1112 = vmul.f32 %v1111, %v1100
      %v1113 = vmul.f32 %v1112, %v1111
      %v1114 = vmul.f32 0.5, %v1113
      %v1115 = vsub.f32 1.5, %v1114
      %v1116 = vmul.f32 %v1111, %v1115
      %vm1117 = vweird.f32 %v1100
      %vm1118 = vweird.f32 %v1111
      %vm1119 = vmor %vm1117, %vm1118
      %v1120 = vsel %vm1119, %v1111, %v1116
      %v1121 = vmul.f32 %v1087, %v1110
      %v1122 = vmul.f32 %v1088, %v1120
      %v1124 = vperm.slane %v1070, 0
      %v1126 = vmul.f32 %v1121, %v1124
      %v1127 = vmul.f32 %v1122, %v1124
      %v1129 = vperm.slane %v1071, 0
      %v1131 = vadd.f32 %v1126, %v1129
      %v1132 = vadd.f32 %v1127, %v1129
      %v1133 = vpack.c.bf16 %v1132, %v1131
      %v1134 = vld [vmem:[%s8] sm:$0xf]
      %v1135 = vld [vmem:[%s8 + $0x4] sm:$0xf]
      %v1136 = vld [vmem:[%s8 + $0x8] sm:$0xf]
      %v1137 = vld [vmem:[%s8 + $0xc] sm:$0xf]
      %v1138 = vld [vmem:[%s9] sm:$0x1]
      %v1140 = vperm.slane %v1138, 0
      %v1146 = vunpack.c.l.b16 %v1134
      %v1147 = vunpack.c.l.b16 %v1135
      %v1148 = vunpack.c.l.b16 %v1136
      %v1149 = vunpack.c.l.b16 %v1137
      %v1150 = vpack.c.b16 %v1147, %v1146
      %v1151 = vpack.c.b16 %v1149, %v1148
      %v1155 = vsel %vm498, %v1133, 0
      %1157 = vmatpush.bf16.msra.mxu0 0
      %1158 = vmatpush.bf16.msra.mxu0 0
      %1159 = vmatpush.bf16.msra.mxu0 0
      %1160 = vmatpush.bf16.msra.mxu0 0
      %1161 = vmatpush.bf16.msra.mxu0 0
      %1162 = vmatpush.bf16.msra.mxu0 0
      %1163 = vmatpush.bf16.msra.mxu0 %v1151
      %1164 = vmatpush.bf16.msra.mxu0 %v1150
      %1165 = vmatmul.bf16.gmra.mxu0 %v1155
      %v1166 = vpop.f32.mrf.mxu0
      %v1167 = vadd.f32 %v1140, %v1166
      %v1168 = vpop.f32.mrf.mxu0
      %v1169 = vadd.f32 %v1140, %v1168
      %1170 = vdwg.mxu0
      %v1171 = vmax.f32 %v1167, 0.0
      %v1172 = vmax.f32 %v1169, 0.0
      %v1173 = vpack.c.bf16 %v1172, %v1171
      %v1174 = vld [vmem:[%s10] sm:$0xf]
      %v1175 = vld [vmem:[%s10 + $0x4] sm:$0xf]
      %v1176 = vld [vmem:[%s10 + $0x8] sm:$0xf]
      %v1177 = vld [vmem:[%s10 + $0xc] sm:$0xf]
      %v1178 = vld [vmem:[%s11] sm:$0x1]
      %v1180 = vperm.slane %v1178, 0
      %v1186 = vunpack.c.l.b16 %v1174
      %v1187 = vunpack.c.l.b16 %v1175
      %v1188 = vunpack.c.l.b16 %v1176
      %v1189 = vunpack.c.l.b16 %v1177
      %v1190 = vpack.c.b16 %v1187, %v1186
      %v1191 = vpack.c.b16 %v1189, %v1188
      %v1195 = vsel %vm498, %v1173, 0
      %1197 = vmatpush.bf16.msra.mxu0 0
      %1198 = vmatpush.bf16.msra.mxu0 0
      %1199 = vmatpush.bf16.msra.mxu0 0
      %1200 = vmatpush.bf16.msra.mxu0 0
      %1201 = vmatpush.bf16.msra.mxu0 0
      %1202 = vmatpush.bf16.msra.mxu0 0
      %1203 = vmatpush.bf16.msra.mxu0 %v1191
      %1204 = vmatpush.bf16.msra.mxu0 %v1190
      %1205 = vmatmul.bf16.gmra.mxu0 %v1195
      %v1206 = vpop.f32.mrf.mxu0
      %v1207 = vadd.f32 %v1180, %v1206
      %v1208 = vpop.f32.mrf.mxu0
      %v1209 = vadd.f32 %v1180, %v1208
      %1210 = vdwg.mxu0
      %v1211 = vadd.f32 %v1131, %v1207
      %v1212 = vadd.f32 %v1132, %v1209
      %v1213 = vld [vmem:[%s12] sm:$0x1]
      %v1214 = vld [vmem:[%s13] sm:$0x1]
      %v1215 = vsel %vm498, %v1211, 0.0
      %1216 = vadd.xlane.f32.xlu0 %v1215
      %v1217 = vpop.xlane.xlu0 %1216
      %v1218 = vsel %vm498, %v1212, 0.0
      %1219 = vadd.xlane.f32.xlu0 %v1218
      %v1220 = vpop.xlane.xlu0 %1219
      %v1221 = vmul.f32 %v1217, %v1084
      %v1222 = vmul.f32 %v1220, %v1084
      %v1223 = vsub.f32 %v1211, %v1221
      %v1224 = vsub.f32 %v1212, %v1222
      %v1225 = vmul.f32 %v1223, %v1223
      %v1226 = vmul.f32 %v1224, %v1224
      %v1227 = vsel %vm498, %v1225, 0.0
      %1228 = vadd.xlane.f32.xlu0 %v1227
      %v1229 = vpop.xlane.xlu0 %1228
      %v1230 = vsel %vm498, %v1226, 0.0
      %1231 = vadd.xlane.f32.xlu0 %v1230
      %v1232 = vpop.xlane.xlu0 %1231
      %v1233 = vmul.f32 %v1229, %v1084
      %v1234 = vmul.f32 %v1232, %v1084
      %v1235 = vadd.f32 %v1233, 1e-05
      %v1236 = vadd.f32 %v1234, 1e-05
      %v1237 = vrsqrt.pop %v1235
      %v1238 = vmul.f32 %v1237, %v1235
      %v1239 = vmul.f32 %v1238, %v1237
      %v1240 = vmul.f32 0.5, %v1239
      %v1241 = vsub.f32 1.5, %v1240
      %v1242 = vmul.f32 %v1237, %v1241
      %vm1243 = vweird.f32 %v1235
      %vm1244 = vweird.f32 %v1237
      %vm1245 = vmor %vm1243, %vm1244
      %v1246 = vsel %vm1245, %v1237, %v1242
      %v1247 = vrsqrt.pop %v1236
      %v1248 = vmul.f32 %v1247, %v1236
      %v1249 = vmul.f32 %v1248, %v1247
      %v1250 = vmul.f32 0.5, %v1249
      %v1251 = vsub.f32 1.5, %v1250
      %v1252 = vmul.f32 %v1247, %v1251
      %vm1253 = vweird.f32 %v1236
      %vm1254 = vweird.f32 %v1247
      %vm1255 = vmor %vm1253, %vm1254
      %v1256 = vsel %vm1255, %v1247, %v1252
      %v1257 = vmul.f32 %v1223, %v1246
      %v1258 = vmul.f32 %v1224, %v1256
      %v1260 = vperm.slane %v1213, 0
      %v1262 = vmul.f32 %v1257, %v1260
      %v1263 = vmul.f32 %v1258, %v1260
      %v1265 = vperm.slane %v1214, 0
      %v1267 = vadd.f32 %v1262, %v1265
      %v1268 = vadd.f32 %v1263, %v1265
      %1269 = vst.msk [vmem:[%s469] sm:$0xff] %vm498, %v1267
      %1270 = vst.msk [vmem:[%s469 + $0x8] sm:$0xff] %vm498, %v1268
      %s1271 = smul.u32 2, %s25
      %p1272 = scmp.lt.s32.totalorder %s1271, 7
      %s1273 = scalar_select %p1272, %s1271, 7
      %s1274 = smul.addr %s1273, 8
      %s1275 = scalar_lea.vmem %s14, %s1274
      // Predicated region
      $region77: #{tpu_custom_call.1} parent=75 // pred_check
        %p1276 = pneg %p342
      $region78: #{tpu_custom_call.1} parent=75 // pred_check_branch
        %1278 = sbr.rel (%p1276) target = $region80
      $region79: #{tpu_custom_call.1} parent=75 // pred_region
        %s1279 = smul.u32 2, %s25
      $region80: #{tpu_custom_call.1} parent=75 // pred_fallthru
        _
    $region76: #{tpu_custom_call.1} parent=5 // pred_fallthru
      _
    %p1280 = scmp.le.s32.totalorder 2, %s20
    // Predicated region
    $region81: #{tpu_custom_call.1} parent=5 // pred_check
      %p1281 = pneg %p1280
    $region82: #{tpu_custom_call.1} parent=5 // pred_check_branch
      %1283 = sbr.rel (%p1281) target = $region84
    $region83: #{tpu_custom_call.1} parent=5 // pred_region
      %s1284 = ssub.s32 %s20, 2
      // Predicated region
      $region85: #{tpu_custom_call.1} parent=83 // pred_check
        %p1285 = pneg %p348
      $region86: #{tpu_custom_call.1} parent=83 // pred_check_branch
        %1287 = sbr.rel (%p1285) target = $region88
      $region87: #{tpu_custom_call.1} parent=83 // pred_region
        %s1288 = smul.u32 2, %s26
        %p1289 = scmp.lt.s32.totalorder %s1288, 7
        %s1290 = scalar_select %p1289, %s1288, 7
        %s1291 = smul.addr %s1290, 8
        %s1292 = scalar_lea.vmem %s14, %s1291
      $region88: #{tpu_custom_call.1} parent=83 // pred_fallthru
        _
    $region84: #{tpu_custom_call.1} parent=5 // pred_fallthru
      _
  $region6: #{tpu_custom_call.1} parent=0 // loop_footer
    %s24 = sadd.s32 1, %s20
  $region7: #{tpu_custom_call.1} parent=0 // loop_footer_branch
    %19 = sbr.rel target = $region3
  $region8: #{tpu_custom_call.1} parent=0 // loop_exit
    _

</llo_original>
